<compile_context>
chip_gen: v7x
topology: tpu7x:2x2x1
jax: 0.10.0
libtpu: 0.0.40
codegen_flags: <defaults>
</compile_context>

<pallas_src>
import functools
import numpy as np
import jax
import jax.numpy as jnp
from jax.experimental import pallas as pl
from jax.experimental.pallas import tpu as pltpu


# ----------------------------- fused Pallas kernel ------------------------------

def _layer_norm(x, g, b, eps):
    mu = jnp.mean(x, axis=-1, keepdims=True)
    var = jnp.mean(jnp.square(x - mu), axis=-1, keepdims=True)
    return (x - mu) * jax.lax.rsqrt(var + eps) * g + b


def _encoder_fused_kernel(pos_ref, nonpad_ref, src_ref, posemb_ref,
                          embw_ref, embb_ref,
                          wqkv_ref, bqkv_ref, wo_ref, bo_ref,
                          ln1g_ref, ln1b_ref, w1_ref, b1_ref,
                          w2_ref, b2_ref, ln2g_ref, ln2b_ref,
                          o_ref, x_scr,
                          *, n_head, d_k, d_v, b_blk, seq_len, d_model,
                          use_mask, inv_temp, eps, pad):
    layer = pl.program_id(1)
    L = seq_len
    rows = b_blk * L

    # ---- layer 0 only: fused embedding (src @ W_emb + b + positional encoding) ----
    @pl.when(layer == 0)
    def _embed():
        src = src_ref[...]
        src = src.reshape(rows, src.shape[-1])
        pe = posemb_ref[...].reshape(rows, d_model)
        x_scr[...] = (jnp.dot(src.astype(jnp.bfloat16), embw_ref[...],
                              preferred_element_type=jnp.float32)
                      + embb_ref[...] + pe)

    x = x_scr[...]                                      # (rows, D) f32, resident across layers
    nonpad = nonpad_ref[...].reshape(rows, 1)           # 1.0 => keep

    # ---- fused QKV projection over the whole (b_blk*L, D) row slab ----
    qkv = (jnp.dot(x.astype(jnp.bfloat16), wqkv_ref[0],
                   preferred_element_type=jnp.float32) + bqkv_ref[0])
    n_qk = n_head * d_k
    wo = wo_ref[0]                                      # (H*d_v, D) bf16

    # causal part of the mask built once, shared by all batch elements in the block
    if use_mask:
        ri = jax.lax.broadcasted_iota(jnp.int32, (L, L), 0)
        ci = jax.lax.broadcasted_iota(jnp.int32, (L, L), 1)
        causal = ci > ri                                # subsequent-position mask

    # ---- per-batch, per-head attention; attention matrix never leaves vregs ----
    blk_out = []
    for b in range(b_blk):                              # static, tiny
        rs = slice(b * L, (b + 1) * L)
        keypad = pos_ref[b] == pad                      # (1, L) bool, built from src_pos
        if use_mask:
            masked = jnp.logical_or(keypad, causal)
        else:
            masked = jnp.broadcast_to(keypad, (L, L))
        neg = jnp.where(masked, -1e9, 0.0)              # additive bias (f32)

        o_b = jnp.zeros((L, d_model), jnp.float32)
        for h in range(n_head):                         # static unrolled, n_head is small
            q = (qkv[rs, h * d_k:(h + 1) * d_k] * inv_temp).astype(jnp.bfloat16)
            k = qkv[rs, n_qk + h * d_k:n_qk + (h + 1) * d_k].astype(jnp.bfloat16)
            v = qkv[rs, 2 * n_qk + h * d_v:2 * n_qk + (h + 1) * d_v].astype(jnp.bfloat16)
            s = jax.lax.dot_general(q, k, (((1,), (1,)), ((), ())),
                                    preferred_element_type=jnp.float32) + neg
            s_max = jnp.max(s, axis=-1, keepdims=True)
            e = jnp.exp(s - s_max)
            denom = jnp.sum(e, axis=-1, keepdims=True)
            attn = e * pl.reciprocal(denom, approx=True)          # EUP, not a VPU divide
            ctx = jnp.dot(attn.astype(jnp.bfloat16), v,
                          preferred_element_type=jnp.float32)     # (L, d_v)
            # accumulate straight into the output projection (no head concatenation)
            o_b = o_b + jnp.dot(ctx.astype(jnp.bfloat16),
                                wo[h * d_v:(h + 1) * d_v, :],
                                preferred_element_type=jnp.float32)
        blk_out.append(o_b)
    attn_out = blk_out[0] if b_blk == 1 else jnp.concatenate(blk_out, axis=0)
    attn_out = attn_out + bo_ref[0]

    # ---- residual + LayerNorm, FFN, residual + LayerNorm, non-pad masking ----
    h1 = _layer_norm(attn_out + x, ln1g_ref[0], ln1b_ref[0], eps) * nonpad
    t = jnp.maximum(jnp.dot(h1.astype(jnp.bfloat16), w1_ref[0],
                            preferred_element_type=jnp.float32) + b1_ref[0], 0.0)
    y = (jnp.dot(t.astype(jnp.bfloat16), w2_ref[0],
                 preferred_element_type=jnp.float32) + b2_ref[0])
    h2 = _layer_norm(y + h1, ln2g_ref[0], ln2b_ref[0], eps) * nonpad

    x_scr[...] = h2                                     # stays resident for the next layer

    @pl.when(layer == pl.num_programs(1) - 1)
    def _store():
        o_ref[...] = h2.reshape(b_blk, L, d_model)      # only the last layer hits HBM


def fused_encoder(params, src_pos_k, nonpad, src_seq, pos_emb,
                  *, use_mask, n_head, d_k, d_v):
    B, L, d_src = src_seq.shape
    n_layers, D, d_qkv = params['wqkv'].shape
    d_inner = params['w1'].shape[-1]
    # batch blocks: keep a "parallel" axis of size >=2 when possible (v7x 2nd TensorCore)
    nb = 2 if (B >= 2 and B % 2 == 0) else 1
    b_blk = B // nb

    kernel = functools.partial(
        _encoder_fused_kernel, n_head=n_head, d_k=d_k, d_v=d_v,
        b_blk=b_blk, seq_len=L, d_model=D, use_mask=use_mask,
        inv_temp=float(1.0 / np.sqrt(d_k)), eps=1e-5, pad=-1)

    per_batch = lambda b, l: (b, 0, 0)
    per_layer = lambda b, l: (l, 0, 0)
    const2 = lambda b, l: (0, 0)

    return pl.pallas_call(
        kernel,
        out_shape=jax.ShapeDtypeStruct((B, L, D), jnp.float32),
        grid=(nb, n_layers),
        in_specs=[
            pl.BlockSpec((b_blk, 1, L), per_batch),          # src_pos keys (int32)
            pl.BlockSpec((b_blk, L, 1), per_batch),          # non-pad mask
            pl.BlockSpec((b_blk, L, d_src), per_batch),      # src_seq
            pl.BlockSpec((b_blk, L, D), per_batch),          # positional encoding gather
            pl.BlockSpec((d_src, D), const2),                # embedding W (bf16)
            pl.BlockSpec((1, D), const2),                    # embedding b
            pl.BlockSpec((1, D, d_qkv), per_layer),          # stacked Wqkv (bf16)
            pl.BlockSpec((1, 1, d_qkv), per_layer),          # stacked bqkv
            pl.BlockSpec((1, n_head * d_v, D), per_layer),   # stacked Wo (bf16)
            pl.BlockSpec((1, 1, D), per_layer),              # stacked bo
            pl.BlockSpec((1, 1, D), per_layer),              # LN1 gamma
            pl.BlockSpec((1, 1, D), per_layer),              # LN1 beta
            pl.BlockSpec((1, D, d_inner), per_layer),        # stacked W1 (bf16)
            pl.BlockSpec((1, 1, d_inner), per_layer),        # stacked b1
            pl.BlockSpec((1, d_inner, D), per_layer),        # stacked W2 (bf16)
            pl.BlockSpec((1, 1, D), per_layer),              # stacked b2
            pl.BlockSpec((1, 1, D), per_layer),              # LN2 gamma
            pl.BlockSpec((1, 1, D), per_layer),              # LN2 beta
        ],
        out_specs=pl.BlockSpec((b_blk, L, D), per_batch),
        scratch_shapes=[pltpu.VMEM((b_blk * L, D), jnp.float32)],   # resident activation
        compiler_params=pltpu.CompilerParams(
            dimension_semantics=("parallel", "arbitrary"),
            vmem_limit_bytes=32 * 1024 * 1024),
    )(src_pos_k, nonpad, src_seq, pos_emb,
      params['emb_w'], params['emb_b'],
      params['wqkv'], params['bqkv'], params['wo'], params['bo'],
      params['ln1_g'], params['ln1_b'], params['w1'], params['b1'],
      params['w2'], params['b2'], params['ln2_g'], params['ln2_b'])


# ----------------------------- model glue ------------------------------

def get_sinusoid_encoding_table(n_position, d_hid, padding_idx=None):
    def cal_angle(position, hid_idx):
        return position / np.power(10000, 2 * (hid_idx // 2) / d_hid)
    table = np.array([[cal_angle(p, j) for j in range(d_hid)] for p in range(n_position)])
    table[:, 0::2] = np.sin(table[:, 0::2])
    table[:, 1::2] = np.cos(table[:, 1::2])
    if padding_idx is not None:
        table[padding_idx] = 0.0
    return jnp.asarray(table, jnp.float32)


@functools.partial(jax.jit, static_argnames=("use_mask", "n_head", "d_k", "d_v"))
def encoder_forward(params, src_seq, src_pos, *, use_mask, n_head, d_k, d_v):
    pad = -1
    nonpad = (src_pos != pad).astype(jnp.float32)[:, :, None]        # (B, L, 1)
    pos_k = src_pos.astype(jnp.int32)[:, None, :]                    # (B, 1, L) for key-pad bias
    pos_emb = jnp.take(params['pos_table'], src_pos + 1, axis=0)     # embedding gather (XLA)
    return fused_encoder(params, pos_k, nonpad, src_seq, pos_emb,
                         use_mask=use_mask, n_head=n_head, d_k=d_k, d_v=d_v)


# ----------------------------- deterministic parameter init ------------------------------

def _normal(key, shape, std):
    return jax.random.normal(key, shape, jnp.float32) * std


def init_encoder_params(key, d_src, len_max, n_layers, n_head, d_k, d_v, d_model, d_inner):
    keys = jax.random.split(key, n_layers + 1)
    emb_w = _normal(keys[0], (d_src, d_model), np.sqrt(2.0 / (d_src + d_model)))
    d_qkv = 2 * n_head * d_k + n_head * d_v
    wqkv, wo, w1, w2 = [], [], [], []
    for l in range(n_layers):
        lk = jax.random.split(keys[l + 1], 6)
        wq = _normal(lk[0], (d_model, n_head * d_k), np.sqrt(2.0 / (d_model + d_k)))
        wk = _normal(lk[1], (d_model, n_head * d_k), np.sqrt(2.0 / (d_model + d_k)))
        wv = _normal(lk[2], (d_model, n_head * d_v), np.sqrt(2.0 / (d_model + d_v)))
        wqkv.append(jnp.concatenate([wq, wk, wv], axis=1))
        wo.append(_normal(lk[3], (n_head * d_v, d_model), np.sqrt(2.0 / (n_head * d_v + d_model))))
        w1.append(_normal(lk[4], (d_model, d_inner), np.sqrt(2.0 / (d_model + d_inner))))
        w2.append(_normal(lk[5], (d_inner, d_model), np.sqrt(2.0 / (d_model + d_inner))))
    return dict(
        emb_w=emb_w.astype(jnp.bfloat16),
        emb_b=jnp.zeros((1, d_model), jnp.float32),
        pos_table=get_sinusoid_encoding_table(len_max + 1, d_model, padding_idx=0),
        # layer-stacked weights (leading layer axis) — bf16 for the MXU, f32 accumulation in-kernel
        wqkv=jnp.stack(wqkv).astype(jnp.bfloat16),                 # (Nl, D, 3*H*d_k)
        bqkv=jnp.zeros((n_layers, 1, d_qkv), jnp.float32),
        wo=jnp.stack(wo).astype(jnp.bfloat16),                     # (Nl, H*d_v, D)
        bo=jnp.zeros((n_layers, 1, d_model), jnp.float32),
        ln1_g=jnp.ones((n_layers, 1, d_model), jnp.float32),
        ln1_b=jnp.zeros((n_layers, 1, d_model), jnp.float32),
        w1=jnp.stack(w1).astype(jnp.bfloat16),                     # (Nl, D, d_inner)
        b1=jnp.zeros((n_layers, 1, d_inner), jnp.float32),
        w2=jnp.stack(w2).astype(jnp.bfloat16),                     # (Nl, d_inner, D)
        b2=jnp.zeros((n_layers, 1, d_model), jnp.float32),
        ln2_g=jnp.ones((n_layers, 1, d_model), jnp.float32),
        ln2_b=jnp.zeros((n_layers, 1, d_model), jnp.float32))


# ----------------------------- main ------------------------------

if __name__ == "__main__":
    B, L = 2, 8
    d_src = 4                     # vector_input=True -> Linear(d_src, d_model) embedding
    d_model, n_head, d_k, d_v, d_inner = 32, 2, 16, 16, 64
    n_layers = 2

    key = jax.random.PRNGKey(0)
    pkey, xkey = jax.random.split(key)
    params = init_encoder_params(pkey, d_src, L, n_layers, n_head, d_k, d_v, d_model, d_inner)

    src_seq = jax.random.normal(xkey, (B, L, d_src), jnp.float32)
    full_pos = jnp.arange(L, dtype=jnp.int32)
    padded_pos = jnp.where(jnp.arange(L) >= L - 2, -1, full_pos)    # pad the tail of batch 1
    src_pos = jnp.stack([full_pos, padded_pos])

    out = encoder_forward(params, src_seq, src_pos, use_mask=True,
                          n_head=n_head, d_k=d_k, d_v=d_v)
    out = jax.block_until_ready(out)
    assert out.shape == (B, L, d_model) and bool(jnp.all(jnp.isfinite(out)))
    print("KERNEL_OK")
</pallas_src>

<mosaic_0001>
module attributes {stable_mosaic.version = 11 : i64} {
  func.func @_encoder_fused_kernel(%arg0: i32, %arg1: i32, %arg2: memref<1x1x8xi32, #tpu.memory_space<vmem>>, %arg3: memref<1x8x1xf32, #tpu.memory_space<vmem>>, %arg4: memref<1x8x4xf32, #tpu.memory_space<vmem>>, %arg5: memref<1x8x32xf32, #tpu.memory_space<vmem>>, %arg6: memref<4x32xbf16, #tpu.memory_space<vmem>>, %arg7: memref<1x32xf32, #tpu.memory_space<vmem>>, %arg8: memref<1x32x96xbf16, #tpu.memory_space<vmem>>, %arg9: memref<1x1x96xf32, #tpu.memory_space<vmem>>, %arg10: memref<1x32x32xbf16, #tpu.memory_space<vmem>>, %arg11: memref<1x1x32xf32, #tpu.memory_space<vmem>>, %arg12: memref<1x1x32xf32, #tpu.memory_space<vmem>>, %arg13: memref<1x1x32xf32, #tpu.memory_space<vmem>>, %arg14: memref<1x32x64xbf16, #tpu.memory_space<vmem>>, %arg15: memref<1x1x64xf32, #tpu.memory_space<vmem>>, %arg16: memref<1x64x32xbf16, #tpu.memory_space<vmem>>, %arg17: memref<1x1x32xf32, #tpu.memory_space<vmem>>, %arg18: memref<1x1x32xf32, #tpu.memory_space<vmem>>, %arg19: memref<1x1x32xf32, #tpu.memory_space<vmem>>, %arg20: memref<1x8x32xf32, #tpu.memory_space<vmem>>, %arg21: memref<8x32xf32, #tpu.memory_space<vmem>>) attributes {dimension_semantics = [#tpu.dimension_semantics<parallel>, #tpu.dimension_semantics<arbitrary>], iteration_bounds = array<i64: 2, 2>, scalar_prefetch = 0 : i64, scratch_operands = 1 : i64, tpu.core_type = #tpu.core_type<tc>, window_params = [{transform_indices = @transform_0, window_bounds = array<i64: 1, 1, 8>}, {transform_indices = @transform_1, window_bounds = array<i64: 1, 8, 1>}, {transform_indices = @transform_2, window_bounds = array<i64: 1, 8, 4>}, {transform_indices = @transform_3, window_bounds = array<i64: 1, 8, 32>}, {pipeline_mode = #tpu.pipeline_mode<synchronous>, transform_indices = @transform_4, window_bounds = array<i64: 4, 32>}, {pipeline_mode = #tpu.pipeline_mode<synchronous>, transform_indices = @transform_5, window_bounds = array<i64: 1, 32>}, {transform_indices = @transform_6, window_bounds = array<i64: 1, 32, 96>}, {transform_indices = @transform_7, window_bounds = array<i64: 1, 1, 96>}, {transform_indices = @transform_8, window_bounds = array<i64: 1, 32, 32>}, {transform_indices = @transform_9, window_bounds = array<i64: 1, 1, 32>}, {transform_indices = @transform_10, window_bounds = array<i64: 1, 1, 32>}, {transform_indices = @transform_11, window_bounds = array<i64: 1, 1, 32>}, {transform_indices = @transform_12, window_bounds = array<i64: 1, 32, 64>}, {transform_indices = @transform_13, window_bounds = array<i64: 1, 1, 64>}, {transform_indices = @transform_14, window_bounds = array<i64: 1, 64, 32>}, {transform_indices = @transform_15, window_bounds = array<i64: 1, 1, 32>}, {transform_indices = @transform_16, window_bounds = array<i64: 1, 1, 32>}, {transform_indices = @transform_17, window_bounds = array<i64: 1, 1, 32>}, {transform_indices = @transform_18, window_bounds = array<i64: 1, 8, 32>}]} {
    %c0_i32 = arith.constant 0 : i32
    %0 = arith.cmpi eq, %arg1, %c0_i32 : i32
    %1 = arith.extui %0 : i1 to i32
    %c0_i32_0 = arith.constant 0 : i32
    %2 = arith.cmpi ne, %1, %c0_i32_0 : i32
    scf.if %2 {
      %c0_75 = arith.constant 0 : index
      %c0_76 = arith.constant 0 : index
      %c0_77 = arith.constant 0 : index
      %165 = vector.load %arg4[%c0_75, %c0_76, %c0_77] : memref<1x8x4xf32, #tpu.memory_space<vmem>>, vector<1x8x4xf32>
      %166 = vector.shape_cast %165 : vector<1x8x4xf32> to vector<8x4xf32>
      %c0_78 = arith.constant 0 : index
      %c0_79 = arith.constant 0 : index
      %c0_80 = arith.constant 0 : index
      %167 = vector.load %arg5[%c0_78, %c0_79, %c0_80] : memref<1x8x32xf32, #tpu.memory_space<vmem>>, vector<1x8x32xf32>
      %168 = vector.shape_cast %167 : vector<1x8x32xf32> to vector<8x32xf32>
      %169 = arith.truncf %166 : vector<8x4xf32> to vector<8x4xbf16>
      %c0_81 = arith.constant 0 : index
      %c0_82 = arith.constant 0 : index
      %170 = vector.load %arg6[%c0_81, %c0_82] : memref<4x32xbf16, #tpu.memory_space<vmem>>, vector<4x32xbf16>
      %cst_83 = arith.constant dense<0.000000e+00> : vector<8x32xf32>
      %171 = tpu.matmul %169, %170, %cst_83 {dimension_numbers = #tpu.dot_dimension_numbers<[1], [0], [0], [1], [0, 0, 1, 1], [], []>} : vector<8x4xbf16>, vector<4x32xbf16>, vector<8x32xf32> -> vector<8x32xf32>
      %c0_84 = arith.constant 0 : index
      %c0_85 = arith.constant 0 : index
      %172 = vector.load %arg7[%c0_84, %c0_85] : memref<1x32xf32, #tpu.memory_space<vmem>>, vector<1x32xf32>
      %173 = vector.broadcast %172 : vector<1x32xf32> to vector<8x32xf32>
      %174 = arith.addf %171, %173 : vector<8x32xf32>
      %175 = arith.addf %174, %168 : vector<8x32xf32>
      %c0_86 = arith.constant 0 : index
      %c0_87 = arith.constant 0 : index
      %176 = vector.load %arg21[%c0_86, %c0_87] : memref<8x32xf32, #tpu.memory_space<vmem>>, vector<8x32xf32>
      tpu.vector_store %arg21[%c0_86, %c0_87], %175 {strides = array<i32>} : memref<8x32xf32, #tpu.memory_space<vmem>>, vector<8x32xf32>,
    } else {
    }
    %c0 = arith.constant 0 : index
    %c0_1 = arith.constant 0 : index
    %3 = vector.load %arg21[%c0, %c0_1] : memref<8x32xf32, #tpu.memory_space<vmem>>, vector<8x32xf32>
    %c0_2 = arith.constant 0 : index
    %c0_3 = arith.constant 0 : index
    %c0_4 = arith.constant 0 : index
    %4 = vector.load %arg3[%c0_2, %c0_3, %c0_4] : memref<1x8x1xf32, #tpu.memory_space<vmem>>, vector<1x8x1xf32>
    %5 = vector.shape_cast %4 : vector<1x8x1xf32> to vector<8x1xf32>
    %6 = arith.truncf %3 : vector<8x32xf32> to vector<8x32xbf16>
    %c0_5 = arith.constant 0 : index
    %c0_6 = arith.constant 0 : index
    %c0_7 = arith.constant 0 : index
    %7 = vector.load %arg8[%c0_5, %c0_6, %c0_7] : memref<1x32x96xbf16, #tpu.memory_space<vmem>>, vector<1x32x96xbf16>
    %8 = vector.shape_cast %7 : vector<1x32x96xbf16> to vector<32x96xbf16>
    %cst = arith.constant dense<0.000000e+00> : vector<8x96xf32>
    %9 = tpu.matmul %6, %8, %cst {dimension_numbers = #tpu.dot_dimension_numbers<[1], [0], [0], [1], [0, 0, 1, 1], [], []>} : vector<8x32xbf16>, vector<32x96xbf16>, vector<8x96xf32> -> vector<8x96xf32>
    %c0_8 = arith.constant 0 : index
    %c0_9 = arith.constant 0 : index
    %c0_10 = arith.constant 0 : index
    %10 = vector.load %arg9[%c0_8, %c0_9, %c0_10] : memref<1x1x96xf32, #tpu.memory_space<vmem>>, vector<1x1x96xf32>
    %11 = vector.shape_cast %10 : vector<1x1x96xf32> to vector<1x96xf32>
    %12 = vector.broadcast %11 : vector<1x96xf32> to vector<8x96xf32>
    %13 = arith.addf %9, %12 : vector<8x96xf32>
    %c0_11 = arith.constant 0 : index
    %c0_12 = arith.constant 0 : index
    %c0_13 = arith.constant 0 : index
    %14 = vector.load %arg10[%c0_11, %c0_12, %c0_13] : memref<1x32x32xbf16, #tpu.memory_space<vmem>>, vector<1x32x32xbf16>
    %15 = vector.shape_cast %14 : vector<1x32x32xbf16> to vector<32x32xbf16>
    %16 = tpu.iota {dimensions = array<i32: 0>} : vector<8x8xi32>
    %17 = tpu.iota {dimensions = array<i32: 1>} : vector<8x8xi32>
    %18 = arith.cmpi sgt, %17, %16 : vector<8x8xi32>
    %c0_14 = arith.constant 0 : index
    %c0_15 = arith.constant 0 : index
    %c0_16 = arith.constant 0 : index
    %19 = vector.load %arg2[%c0_14, %c0_15, %c0_16] : memref<1x1x8xi32, #tpu.memory_space<vmem>>, vector<1x1x8xi32>
    %20 = vector.shape_cast %19 : vector<1x1x8xi32> to vector<1x8xi32>
    %c-1_i32 = arith.constant -1 : i32
    %21 = vector.broadcast %c-1_i32 : i32 to vector<1x8xi32>
    %22 = arith.cmpi eq, %20, %21 : vector<1x8xi32>
    %23 = vector.broadcast %22 : vector<1x8xi1> to vector<8x8xi1>
    %24 = arith.ori %23, %18 : vector<8x8xi1>
    %cst_17 = arith.constant -1.000000e+09 : f32
    %cst_18 = arith.constant 0.000000e+00 : f32
    %25 = vector.broadcast %cst_17 : f32 to vector<8x8xf32>
    %26 = vector.broadcast %cst_18 : f32 to vector<8x8xf32>
    %27 = arith.select %24, %25, %26 : vector<8x8xi1>, vector<8x8xf32>
    %cst_19 = arith.constant 0.000000e+00 : f32
    %28 = vector.broadcast %cst_19 : f32 to vector<8x32xf32>
    %29 = vector.extract_strided_slice %13 {offsets = [0, 0], sizes = [8, 16], strides = [1, 1]} : vector<8x96xf32> to vector<8x16xf32>
    %cst_20 = arith.constant 2.500000e-01 : f32
    %30 = vector.broadcast %cst_20 : f32 to vector<8x16xf32>
    %31 = arith.mulf %29, %30 : vector<8x16xf32>
    %32 = arith.truncf %31 : vector<8x16xf32> to vector<8x16xbf16>
    %33 = vector.extract_strided_slice %13 {offsets = [0, 32], sizes = [8, 16], strides = [1, 1]} : vector<8x96xf32> to vector<8x16xf32>
    %34 = arith.truncf %33 : vector<8x16xf32> to vector<8x16xbf16>
    %35 = vector.extract_strided_slice %13 {offsets = [0, 64], sizes = [8, 16], strides = [1, 1]} : vector<8x96xf32> to vector<8x16xf32>
    %36 = arith.truncf %35 : vector<8x16xf32> to vector<8x16xbf16>
    %cst_21 = arith.constant dense<0.000000e+00> : vector<8x8xf32>
    %37 = tpu.matmul %32, %34, %cst_21 {dimension_numbers = #tpu.dot_dimension_numbers<[1], [1], [0], [0], [0, 0, 1, 0], [], []>} : vector<8x16xbf16>, vector<8x16xbf16>, vector<8x8xf32> -> vector<8x8xf32>
    %38 = arith.addf %37, %27 : vector<8x8xf32>
    %cst_22 = arith.constant dense<0xFF800000> : vector<8xf32>
    %39 = vector.multi_reduction <maximumf>, %38, %cst_22 [1] : vector<8x8xf32> to vector<8xf32>
    %40 = vector.shape_cast %39 : vector<8xf32> to vector<8x1xf32>
    %41 = vector.broadcast %40 : vector<8x1xf32> to vector<8x8xf32>
    %42 = arith.subf %38, %41 : vector<8x8xf32>
    %43 = math.exp %42 : vector<8x8xf32>
    %cst_23 = arith.constant dense<0.000000e+00> : vector<8xf32>
    %44 = vector.multi_reduction <add>, %43, %cst_23 [1] : vector<8x8xf32> to vector<8xf32>
    %45 = vector.shape_cast %44 : vector<8xf32> to vector<8x1xf32>
    %46 = tpu.reciprocal %45 {approx = true} : vector<8x1xf32> -> vector<8x1xf32>
    %47 = vector.broadcast %46 : vector<8x1xf32> to vector<8x8xf32>
    %48 = arith.mulf %43, %47 : vector<8x8xf32>
    %49 = arith.truncf %48 : vector<8x8xf32> to vector<8x8xbf16>
    %cst_24 = arith.constant dense<0.000000e+00> : vector<8x16xf32>
    %50 = tpu.matmul %49, %36, %cst_24 {dimension_numbers = #tpu.dot_dimension_numbers<[1], [0], [0], [1], [0, 0, 1, 1], [], []>} : vector<8x8xbf16>, vector<8x16xbf16>, vector<8x16xf32> -> vector<8x16xf32>
    %51 = arith.truncf %50 : vector<8x16xf32> to vector<8x16xbf16>
    %52 = vector.extract_strided_slice %15 {offsets = [0, 0], sizes = [16, 32], strides = [1, 1]} : vector<32x32xbf16> to vector<16x32xbf16>
    %cst_25 = arith.constant dense<0.000000e+00> : vector<8x32xf32>
    %53 = tpu.matmul %51, %52, %cst_25 {dimension_numbers = #tpu.dot_dimension_numbers<[1], [0], [0], [1], [0, 0, 1, 1], [], []>} : vector<8x16xbf16>, vector<16x32xbf16>, vector<8x32xf32> -> vector<8x32xf32>
    %54 = arith.addf %28, %53 : vector<8x32xf32>
    %55 = vector.extract_strided_slice %13 {offsets = [0, 16], sizes = [8, 16], strides = [1, 1]} : vector<8x96xf32> to vector<8x16xf32>
    %cst_26 = arith.constant 2.500000e-01 : f32
    %56 = vector.broadcast %cst_26 : f32 to vector<8x16xf32>
    %57 = arith.mulf %55, %56 : vector<8x16xf32>
    %58 = arith.truncf %57 : vector<8x16xf32> to vector<8x16xbf16>
    %59 = vector.extract_strided_slice %13 {offsets = [0, 48], sizes = [8, 16], strides = [1, 1]} : vector<8x96xf32> to vector<8x16xf32>
    %60 = arith.truncf %59 : vector<8x16xf32> to vector<8x16xbf16>
    %61 = vector.extract_strided_slice %13 {offsets = [0, 80], sizes = [8, 16], strides = [1, 1]} : vector<8x96xf32> to vector<8x16xf32>
    %62 = arith.truncf %61 : vector<8x16xf32> to vector<8x16xbf16>
    %cst_27 = arith.constant dense<0.000000e+00> : vector<8x8xf32>
    %63 = tpu.matmul %58, %60, %cst_27 {dimension_numbers = #tpu.dot_dimension_numbers<[1], [1], [0], [0], [0, 0, 1, 0], [], []>} : vector<8x16xbf16>, vector<8x16xbf16>, vector<8x8xf32> -> vector<8x8xf32>
    %64 = arith.addf %63, %27 : vector<8x8xf32>
    %cst_28 = arith.constant dense<0xFF800000> : vector<8xf32>
    %65 = vector.multi_reduction <maximumf>, %64, %cst_28 [1] : vector<8x8xf32> to vector<8xf32>
    %66 = vector.shape_cast %65 : vector<8xf32> to vector<8x1xf32>
    %67 = vector.broadcast %66 : vector<8x1xf32> to vector<8x8xf32>
    %68 = arith.subf %64, %67 : vector<8x8xf32>
    %69 = math.exp %68 : vector<8x8xf32>
    %cst_29 = arith.constant dense<0.000000e+00> : vector<8xf32>
    %70 = vector.multi_reduction <add>, %69, %cst_29 [1] : vector<8x8xf32> to vector<8xf32>
    %71 = vector.shape_cast %70 : vector<8xf32> to vector<8x1xf32>
    %72 = tpu.reciprocal %71 {approx = true} : vector<8x1xf32> -> vector<8x1xf32>
    %73 = vector.broadcast %72 : vector<8x1xf32> to vector<8x8xf32>
    %74 = arith.mulf %69, %73 : vector<8x8xf32>
    %75 = arith.truncf %74 : vector<8x8xf32> to vector<8x8xbf16>
    %cst_30 = arith.constant dense<0.000000e+00> : vector<8x16xf32>
    %76 = tpu.matmul %75, %62, %cst_30 {dimension_numbers = #tpu.dot_dimension_numbers<[1], [0], [0], [1], [0, 0, 1, 1], [], []>} : vector<8x8xbf16>, vector<8x16xbf16>, vector<8x16xf32> -> vector<8x16xf32>
    %77 = arith.truncf %76 : vector<8x16xf32> to vector<8x16xbf16>
    %78 = vector.extract_strided_slice %15 {offsets = [16, 0], sizes = [16, 32], strides = [1, 1]} : vector<32x32xbf16> to vector<16x32xbf16>
    %cst_31 = arith.constant dense<0.000000e+00> : vector<8x32xf32>
    %79 = tpu.matmul %77, %78, %cst_31 {dimension_numbers = #tpu.dot_dimension_numbers<[1], [0], [0], [1], [0, 0, 1, 1], [], []>} : vector<8x16xbf16>, vector<16x32xbf16>, vector<8x32xf32> -> vector<8x32xf32>
    %80 = arith.addf %54, %79 : vector<8x32xf32>
    %c0_32 = arith.constant 0 : index
    %c0_33 = arith.constant 0 : index
    %c0_34 = arith.constant 0 : index
    %81 = vector.load %arg11[%c0_32, %c0_33, %c0_34] : memref<1x1x32xf32, #tpu.memory_space<vmem>>, vector<1x1x32xf32>
    %82 = vector.shape_cast %81 : vector<1x1x32xf32> to vector<1x32xf32>
    %83 = vector.broadcast %82 : vector<1x32xf32> to vector<8x32xf32>
    %84 = arith.addf %80, %83 : vector<8x32xf32>
    %85 = arith.addf %84, %3 : vector<8x32xf32>
    %c0_35 = arith.constant 0 : index
    %c0_36 = arith.constant 0 : index
    %c0_37 = arith.constant 0 : index
    %86 = vector.load %arg12[%c0_35, %c0_36, %c0_37] : memref<1x1x32xf32, #tpu.memory_space<vmem>>, vector<1x1x32xf32>
    %87 = vector.shape_cast %86 : vector<1x1x32xf32> to vector<1x32xf32>
    %c0_38 = arith.constant 0 : index
    %c0_39 = arith.constant 0 : index
    %c0_40 = arith.constant 0 : index
    %88 = vector.load %arg13[%c0_38, %c0_39, %c0_40] : memref<1x1x32xf32, #tpu.memory_space<vmem>>, vector<1x1x32xf32>
    %89 = vector.shape_cast %88 : vector<1x1x32xf32> to vector<1x32xf32>
    %cst_41 = arith.constant dense<0.000000e+00> : vector<8xf32>
    %90 = vector.multi_reduction <add>, %85, %cst_41 [1] : vector<8x32xf32> to vector<8xf32>
    %91 = vector.shape_cast %90 : vector<8xf32> to vector<8x1xf32>
    %cst_42 = arith.constant 3.200000e+01 : f32
    %92 = vector.broadcast %cst_42 : f32 to vector<8x1xf32>
    %93 = arith.divf %91, %92 : vector<8x1xf32>
    %94 = vector.broadcast %93 : vector<8x1xf32> to vector<8x32xf32>
    %95 = arith.subf %85, %94 : vector<8x32xf32>
    %96 = arith.mulf %95, %95 : vector<8x32xf32>
    %cst_43 = arith.constant dense<0.000000e+00> : vector<8xf32>
    %97 = vector.multi_reduction <add>, %96, %cst_43 [1] : vector<8x32xf32> to vector<8xf32>
    %98 = vector.shape_cast %97 : vector<8xf32> to vector<8x1xf32>
    %cst_44 = arith.constant 3.200000e+01 : f32
    %99 = vector.broadcast %cst_44 : f32 to vector<8x1xf32>
    %100 = arith.divf %98, %99 : vector<8x1xf32>
    %101 = vector.broadcast %93 : vector<8x1xf32> to vector<8x32xf32>
    %102 = arith.subf %85, %101 : vector<8x32xf32>
    %cst_45 = arith.constant 9.99999974E-6 : f32
    %103 = vector.broadcast %cst_45 : f32 to vector<8x1xf32>
    %104 = arith.addf %100, %103 : vector<8x1xf32>
    %105 = math.rsqrt %104 : vector<8x1xf32>
    %106 = vector.broadcast %105 : vector<8x1xf32> to vector<8x32xf32>
    %107 = arith.mulf %102, %106 : vector<8x32xf32>
    %108 = vector.broadcast %87 : vector<1x32xf32> to vector<8x32xf32>
    %109 = arith.mulf %107, %108 : vector<8x32xf32>
    %110 = vector.broadcast %89 : vector<1x32xf32> to vector<8x32xf32>
    %111 = arith.addf %109, %110 : vector<8x32xf32>
    %112 = vector.broadcast %5 : vector<8x1xf32> to vector<8x32xf32>
    %113 = arith.mulf %111, %112 : vector<8x32xf32>
    %114 = arith.truncf %113 : vector<8x32xf32> to vector<8x32xbf16>
    %c0_46 = arith.constant 0 : index
    %c0_47 = arith.constant 0 : index
    %c0_48 = arith.constant 0 : index
    %115 = vector.load %arg14[%c0_46, %c0_47, %c0_48] : memref<1x32x64xbf16, #tpu.memory_space<vmem>>, vector<1x32x64xbf16>
    %116 = vector.shape_cast %115 : vector<1x32x64xbf16> to vector<32x64xbf16>
    %cst_49 = arith.constant dense<0.000000e+00> : vector<8x64xf32>
    %117 = tpu.matmul %114, %116, %cst_49 {dimension_numbers = #tpu.dot_dimension_numbers<[1], [0], [0], [1], [0, 0, 1, 1], [], []>} : vector<8x32xbf16>, vector<32x64xbf16>, vector<8x64xf32> -> vector<8x64xf32>
    %c0_50 = arith.constant 0 : index
    %c0_51 = arith.constant 0 : index
    %c0_52 = arith.constant 0 : index
    %118 = vector.load %arg15[%c0_50, %c0_51, %c0_52] : memref<1x1x64xf32, #tpu.memory_space<vmem>>, vector<1x1x64xf32>
    %119 = vector.shape_cast %118 : vector<1x1x64xf32> to vector<1x64xf32>
    %120 = vector.broadcast %119 : vector<1x64xf32> to vector<8x64xf32>
    %121 = arith.addf %117, %120 : vector<8x64xf32>
    %cst_53 = arith.constant 0.000000e+00 : f32
    %122 = vector.broadcast %cst_53 : f32 to vector<8x64xf32>
    %123 = arith.maximumf %121, %122 : vector<8x64xf32>
    %124 = arith.truncf %123 : vector<8x64xf32> to vector<8x64xbf16>
    %c0_54 = arith.constant 0 : index
    %c0_55 = arith.constant 0 : index
    %c0_56 = arith.constant 0 : index
    %125 = vector.load %arg16[%c0_54, %c0_55, %c0_56] : memref<1x64x32xbf16, #tpu.memory_space<vmem>>, vector<1x64x32xbf16>
    %126 = vector.shape_cast %125 : vector<1x64x32xbf16> to vector<64x32xbf16>
    %cst_57 = arith.constant dense<0.000000e+00> : vector<8x32xf32>
    %127 = tpu.matmul %124, %126, %cst_57 {dimension_numbers = #tpu.dot_dimension_numbers<[1], [0], [0], [1], [0, 0, 1, 1], [], []>} : vector<8x64xbf16>, vector<64x32xbf16>, vector<8x32xf32> -> vector<8x32xf32>
    %c0_58 = arith.constant 0 : index
    %c0_59 = arith.constant 0 : index
    %c0_60 = arith.constant 0 : index
    %128 = vector.load %arg17[%c0_58, %c0_59, %c0_60] : memref<1x1x32xf32, #tpu.memory_space<vmem>>, vector<1x1x32xf32>
    %129 = vector.shape_cast %128 : vector<1x1x32xf32> to vector<1x32xf32>
    %130 = vector.broadcast %129 : vector<1x32xf32> to vector<8x32xf32>
    %131 = arith.addf %127, %130 : vector<8x32xf32>
    %132 = arith.addf %131, %113 : vector<8x32xf32>
    %c0_61 = arith.constant 0 : index
    %c0_62 = arith.constant 0 : index
    %c0_63 = arith.constant 0 : index
    %133 = vector.load %arg18[%c0_61, %c0_62, %c0_63] : memref<1x1x32xf32, #tpu.memory_space<vmem>>, vector<1x1x32xf32>
    %134 = vector.shape_cast %133 : vector<1x1x32xf32> to vector<1x32xf32>
    %c0_64 = arith.constant 0 : index
    %c0_65 = arith.constant 0 : index
    %c0_66 = arith.constant 0 : index
    %135 = vector.load %arg19[%c0_64, %c0_65, %c0_66] : memref<1x1x32xf32, #tpu.memory_space<vmem>>, vector<1x1x32xf32>
    %136 = vector.shape_cast %135 : vector<1x1x32xf32> to vector<1x32xf32>
    %cst_67 = arith.constant dense<0.000000e+00> : vector<8xf32>
    %137 = vector.multi_reduction <add>, %132, %cst_67 [1] : vector<8x32xf32> to vector<8xf32>
    %138 = vector.shape_cast %137 : vector<8xf32> to vector<8x1xf32>
    %cst_68 = arith.constant 3.200000e+01 : f32
    %139 = vector.broadcast %cst_68 : f32 to vector<8x1xf32>
    %140 = arith.divf %138, %139 : vector<8x1xf32>
    %141 = vector.broadcast %140 : vector<8x1xf32> to vector<8x32xf32>
    %142 = arith.subf %132, %141 : vector<8x32xf32>
    %143 = arith.mulf %142, %142 : vector<8x32xf32>
    %cst_69 = arith.constant dense<0.000000e+00> : vector<8xf32>
    %144 = vector.multi_reduction <add>, %143, %cst_69 [1] : vector<8x32xf32> to vector<8xf32>
    %145 = vector.shape_cast %144 : vector<8xf32> to vector<8x1xf32>
    %cst_70 = arith.constant 3.200000e+01 : f32
    %146 = vector.broadcast %cst_70 : f32 to vector<8x1xf32>
    %147 = arith.divf %145, %146 : vector<8x1xf32>
    %148 = vector.broadcast %140 : vector<8x1xf32> to vector<8x32xf32>
    %149 = arith.subf %132, %148 : vector<8x32xf32>
    %cst_71 = arith.constant 9.99999974E-6 : f32
    %150 = vector.broadcast %cst_71 : f32 to vector<8x1xf32>
    %151 = arith.addf %147, %150 : vector<8x1xf32>
    %152 = math.rsqrt %151 : vector<8x1xf32>
    %153 = vector.broadcast %152 : vector<8x1xf32> to vector<8x32xf32>
    %154 = arith.mulf %149, %153 : vector<8x32xf32>
    %155 = vector.broadcast %134 : vector<1x32xf32> to vector<8x32xf32>
    %156 = arith.mulf %154, %155 : vector<8x32xf32>
    %157 = vector.broadcast %136 : vector<1x32xf32> to vector<8x32xf32>
    %158 = arith.addf %156, %157 : vector<8x32xf32>
    %159 = vector.broadcast %5 : vector<8x1xf32> to vector<8x32xf32>
    %160 = arith.mulf %158, %159 : vector<8x32xf32>
    %c0_72 = arith.constant 0 : index
    %c0_73 = arith.constant 0 : index
    %161 = vector.load %arg21[%c0_72, %c0_73] : memref<8x32xf32, #tpu.memory_space<vmem>>, vector<8x32xf32>
    tpu.vector_store %arg21[%c0_72, %c0_73], %160 {strides = array<i32>} : memref<8x32xf32, #tpu.memory_space<vmem>>, vector<8x32xf32>,
    %c1_i32 = arith.constant 1 : i32
    %162 = arith.cmpi eq, %arg1, %c1_i32 : i32
    %163 = arith.extui %162 : i1 to i32
    %c0_i32_74 = arith.constant 0 : i32
    %164 = arith.cmpi ne, %163, %c0_i32_74 : i32
    scf.if %164 {
      %165 = vector.shape_cast %160 : vector<8x32xf32> to vector<1x8x32xf32>
      %c0_75 = arith.constant 0 : index
      %c0_76 = arith.constant 0 : index
      %c0_77 = arith.constant 0 : index
      %166 = vector.load %arg20[%c0_75, %c0_76, %c0_77] : memref<1x8x32xf32, #tpu.memory_space<vmem>>, vector<1x8x32xf32>
      tpu.vector_store %arg20[%c0_75, %c0_76, %c0_77], %165 {strides = array<i32>} : memref<1x8x32xf32, #tpu.memory_space<vmem>>, vector<1x8x32xf32>,
    } else {
    }
    return
  }
  func.func @transform_0(%arg0: i32, %arg1: i32) -> (i32, i32, i32) {
    %c0_i32 = arith.constant 0 : i32
    %c0_i32_0 = arith.constant 0 : i32
    %c0_i32_1 = arith.constant 0 : i32
    return %arg0, %c0_i32, %c0_i32_0 : i32, i32, i32
  }
  func.func @transform_1(%arg0: i32, %arg1: i32) -> (i32, i32, i32) {
    %c0_i32 = arith.constant 0 : i32
    %c0_i32_0 = arith.constant 0 : i32
    %c0_i32_1 = arith.constant 0 : i32
    return %arg0, %c0_i32, %c0_i32_0 : i32, i32, i32
  }
  func.func @transform_2(%arg0: i32, %arg1: i32) -> (i32, i32, i32) {
    %c0_i32 = arith.constant 0 : i32
    %c0_i32_0 = arith.constant 0 : i32
    %c0_i32_1 = arith.constant 0 : i32
    return %arg0, %c0_i32, %c0_i32_0 : i32, i32, i32
  }
  func.func @transform_3(%arg0: i32, %arg1: i32) -> (i32, i32, i32) {
    %c0_i32 = arith.constant 0 : i32
    %c0_i32_0 = arith.constant 0 : i32
    %c0_i32_1 = arith.constant 0 : i32
    return %arg0, %c0_i32, %c0_i32_0 : i32, i32, i32
  }
  func.func @transform_4(%arg0: i32, %arg1: i32) -> (i32, i32) {
    %c0_i32 = arith.constant 0 : i32
    %c0_i32_0 = arith.constant 0 : i32
    %c0_i32_1 = arith.constant 0 : i32
    return %c0_i32, %c0_i32_0 : i32, i32
  }
  func.func @transform_5(%arg0: i32, %arg1: i32) -> (i32, i32) {
    %c0_i32 = arith.constant 0 : i32
    %c0_i32_0 = arith.constant 0 : i32
    %c0_i32_1 = arith.constant 0 : i32
    return %c0_i32, %c0_i32_0 : i32, i32
  }
  func.func @transform_6(%arg0: i32, %arg1: i32) -> (i32, i32, i32) {
    %c0_i32 = arith.constant 0 : i32
    %c0_i32_0 = arith.constant 0 : i32
    %c0_i32_1 = arith.constant 0 : i32
    return %arg1, %c0_i32, %c0_i32_0 : i32, i32, i32
  }
  func.func @transform_7(%arg0: i32, %arg1: i32) -> (i32, i32, i32) {
    %c0_i32 = arith.constant 0 : i32
    %c0_i32_0 = arith.constant 0 : i32
    %c0_i32_1 = arith.constant 0 : i32
    return %arg1, %c0_i32, %c0_i32_0 : i32, i32, i32
  }
  func.func @transform_8(%arg0: i32, %arg1: i32) -> (i32, i32, i32) {
    %c0_i32 = arith.constant 0 : i32
    %c0_i32_0 = arith.constant 0 : i32
    %c0_i32_1 = arith.constant 0 : i32
    return %arg1, %c0_i32, %c0_i32_0 : i32, i32, i32
  }
  func.func @transform_9(%arg0: i32, %arg1: i32) -> (i32, i32, i32) {
    %c0_i32 = arith.constant 0 : i32
    %c0_i32_0 = arith.constant 0 : i32
    %c0_i32_1 = arith.constant 0 : i32
    return %arg1, %c0_i32, %c0_i32_0 : i32, i32, i32
  }
  func.func @transform_10(%arg0: i32, %arg1: i32) -> (i32, i32, i32) {
    %c0_i32 = arith.constant 0 : i32
    %c0_i32_0 = arith.constant 0 : i32
    %c0_i32_1 = arith.constant 0 : i32
    return %arg1, %c0_i32, %c0_i32_0 : i32, i32, i32
  }
  func.func @transform_11(%arg0: i32, %arg1: i32) -> (i32, i32, i32) {
    %c0_i32 = arith.constant 0 : i32
    %c0_i32_0 = arith.constant 0 : i32
    %c0_i32_1 = arith.constant 0 : i32
    return %arg1, %c0_i32, %c0_i32_0 : i32, i32, i32
  }
  func.func @transform_12(%arg0: i32, %arg1: i32) -> (i32, i32, i32) {
    %c0_i32 = arith.constant 0 : i32
    %c0_i32_0 = arith.constant 0 : i32
    %c0_i32_1 = arith.constant 0 : i32
    return %arg1, %c0_i32, %c0_i32_0 : i32, i32, i32
  }
  func.func @transform_13(%arg0: i32, %arg1: i32) -> (i32, i32, i32) {
    %c0_i32 = arith.constant 0 : i32
    %c0_i32_0 = arith.constant 0 : i32
    %c0_i32_1 = arith.constant 0 : i32
    return %arg1, %c0_i32, %c0_i32_0 : i32, i32, i32
  }
  func.func @transform_14(%arg0: i32, %arg1: i32) -> (i32, i32, i32) {
    %c0_i32 = arith.constant 0 : i32
    %c0_i32_0 = arith.constant 0 : i32
    %c0_i32_1 = arith.constant 0 : i32
    return %arg1, %c0_i32, %c0_i32_0 : i32, i32, i32
  }
  func.func @transform_15(%arg0: i32, %arg1: i32) -> (i32, i32, i32) {
    %c0_i32 = arith.constant 0 : i32
    %c0_i32_0 = arith.constant 0 : i32
    %c0_i32_1 = arith.constant 0 : i32
    return %arg1, %c0_i32, %c0_i32_0 : i32, i32, i32
  }
  func.func @transform_16(%arg0: i32, %arg1: i32) -> (i32, i32, i32) {
    %c0_i32 = arith.constant 0 : i32
    %c0_i32_0 = arith.constant 0 : i32
    %c0_i32_1 = arith.constant 0 : i32
    return %arg1, %c0_i32, %c0_i32_0 : i32, i32, i32
  }
  func.func @transform_17(%arg0: i32, %arg1: i32) -> (i32, i32, i32) {
    %c0_i32 = arith.constant 0 : i32
    %c0_i32_0 = arith.constant 0 : i32
    %c0_i32_1 = arith.constant 0 : i32
    return %arg1, %c0_i32, %c0_i32_0 : i32, i32, i32
  }
  func.func @transform_18(%arg0: i32, %arg1: i32) -> (i32, i32, i32) {
    %c0_i32 = arith.constant 0 : i32
    %c0_i32_0 = arith.constant 0 : i32
    %c0_i32_1 = arith.constant 0 : i32
    return %arg0, %c0_i32, %c0_i32_0 : i32, i32, i32
  }
}

</mosaic_0001>

<llo_original>
// kernel: encoder_forward.1
$region0: #{encoder_forward.1}
  #allocation0 [shape = 'u32[]', space=smem, size = 0x4, offset = 0x4, fixed_abs, tag = 'smem constant byte address 0x4 - core index']
  #allocation1 [shape = 'u32[144,128]{1,0:T(1,128)}', space=vmem, size = 0x12000, scoped, tag = 'internal scratch']
  #allocation2 [shape = 'f32[8,32]{1,0:T(8,128)}', space=vmem, size = 0x1000, scoped, tag = 'scratch operand']
  %s0 = inlined_call_operand.vmem [shape: s32[2,1,8], index: 0, kind: input, shape index: {}]
  %s1 = inlined_call_operand.vmem [shape: f32[2,8,1], index: 1, kind: input, shape index: {}]
  %s2 = inlined_call_operand.vmem [shape: f32[2,8,4], index: 2, kind: input, shape index: {}]
  %s3 = inlined_call_operand.vmem [shape: f32[2,8,32], index: 3, kind: input, shape index: {}]
  %s4 = inlined_call_operand.vmem [shape: bf16[4,32], index: 4, kind: input, shape index: {}]
  %s5 = inlined_call_operand.vmem [shape: f32[1,32], index: 5, kind: input, shape index: {}]
  %s6 = inlined_call_operand.vmem [shape: bf16[2,32,96], index: 6, kind: input, shape index: {}]
  %s7 = inlined_call_operand.vmem [shape: f32[2,1,96], index: 7, kind: input, shape index: {}]
  %s8 = inlined_call_operand.vmem [shape: bf16[2,32,32], index: 8, kind: input, shape index: {}]
  %s9 = inlined_call_operand.vmem [shape: f32[2,1,32], index: 9, kind: input, shape index: {}]
  %s10 = inlined_call_operand.vmem [shape: f32[2,1,32], index: 10, kind: input, shape index: {}]
  %s11 = inlined_call_operand.vmem [shape: f32[2,1,32], index: 11, kind: input, shape index: {}]
  %s12 = inlined_call_operand.vmem [shape: bf16[2,32,64], index: 12, kind: input, shape index: {}]
  %s13 = inlined_call_operand.vmem [shape: f32[2,1,64], index: 13, kind: input, shape index: {}]
  %s14 = inlined_call_operand.vmem [shape: bf16[2,64,32], index: 14, kind: input, shape index: {}]
  %s15 = inlined_call_operand.vmem [shape: f32[2,1,32], index: 15, kind: input, shape index: {}]
  %s16 = inlined_call_operand.vmem [shape: f32[2,1,32], index: 16, kind: input, shape index: {}]
  %s17 = inlined_call_operand.vmem [shape: f32[2,1,32], index: 17, kind: input, shape index: {}]
  %s18 = inlined_call_operand.hbm [shape: f32[2,8,32], index: 18, kind: output, shape index: {}]
  %s19 = sld [smem:[#allocation0]]
  $region113: #{encoder_forward.1} parent=0
    _
  %s21 = ssub.s32 1, %s19
  %s22 = scalar_select 0, %s21, %s19
  $region1: #{encoder_forward.1} parent=0
    #allocation3 [shape = 'u8[8192]{0}', space=vmem, size = 0x2000, scoped, tag = 'output window, operand 0']
    #allocation4 [shape = 's32[2]{0}', space=sflag, size = 0x8, scoped, tag = 'scoped memory for encoder_forward.1']
    %23 = vsyncpa [#allocation4], 0
    %s24 = scalar_lea.sflag [#allocation4], 1
    %25 = vsyncpa %s24, 0
    loop: start=0, step=1, limit=6
    $region2: #{encoder_forward.1} parent=1 // loop_pre_header
      _
    $region3: #{encoder_forward.1} parent=1 // loop_header
      %s27 = sphi 0, %s31
      %p28 = scmp.ge.s32.totalorder %s27, 6
      %s34 = sphi 0, %s46
      %s35 = sphi 0, %s42
      %s36 = sphi 0, %s34
      %s37 = sphi 0, %s35
      %s38 = sphi 0, %s36
      %s39 = sphi 0, %s37
      %s49 = sphi 0, %s51
      %s52 = sphi 0, %s49
      %s53 = sphi 0, %s52
      %s69 = sphi 0, %s53
      %s75 = sphi 0, %s77
      %s78 = sphi 0, %s75
      %s79 = sphi 0, %s78
      %s95 = sphi 0, %s79
      %s101 = sphi 0, %s103
      %s104 = sphi 0, %s101
      %s105 = sphi 0, %s104
      %s121 = sphi 0, %s105
      %s127 = sphi 0, %s129
      %s130 = sphi 0, %s127
      %s131 = sphi 0, %s130
      %s147 = sphi 0, %s131
      %s151 = sphi 0, %s151
      %s153 = sphi 0, %s151
      %s154 = sphi 0, %s153
      %s168 = sphi 0, %s154
      %s172 = sphi 0, %s172
      %s174 = sphi 0, %s172
      %s175 = sphi 0, %s174
      %s189 = sphi 0, %s175
      %s195 = sphi 0, %s197
      %s198 = sphi 0, %s195
      %s199 = sphi 0, %s198
      %s215 = sphi 0, %s199
      %s221 = sphi 0, %s223
      %s224 = sphi 0, %s221
      %s225 = sphi 0, %s224
      %s241 = sphi 0, %s225
      %s247 = sphi 0, %s249
      %s250 = sphi 0, %s247
      %s251 = sphi 0, %s250
      %s267 = sphi 0, %s251
      %s273 = sphi 0, %s275
      %s276 = sphi 0, %s273
      %s277 = sphi 0, %s276
      %s293 = sphi 0, %s277
      %s299 = sphi 0, %s301
      %s302 = sphi 0, %s299
      %s303 = sphi 0, %s302
      %s319 = sphi 0, %s303
      %s325 = sphi 0, %s327
      %s328 = sphi 0, %s325
      %s329 = sphi 0, %s328
      %s345 = sphi 0, %s329
      %s351 = sphi 0, %s353
      %s354 = sphi 0, %s351
      %s355 = sphi 0, %s354
      %s371 = sphi 0, %s355
      %s377 = sphi 0, %s379
      %s380 = sphi 0, %s377
      %s381 = sphi 0, %s380
      %s397 = sphi 0, %s381
      %s403 = sphi 0, %s405
      %s406 = sphi 0, %s403
      %s407 = sphi 0, %s406
      %s423 = sphi 0, %s407
      %s429 = sphi 0, %s431
      %s432 = sphi 0, %s429
      %s433 = sphi 0, %s432
      %s449 = sphi 0, %s433
      %s455 = sphi 0, %s457
      %s458 = sphi 0, %s455
      %s459 = sphi 0, %s458
      %s475 = sphi 0, %s459
      %s481 = sphi 0, %s483
      %s484 = sphi 0, %s481
      %s485 = sphi 0, %s484
      %s501 = sphi 0, %s485
      %s507 = sphi 0, %s509
      %s510 = sphi 0, %s507
      %s511 = sphi 0, %s510
      %s527 = sphi 0, %s511
    $region4: #{encoder_forward.1} parent=1 // loop_header_branch
      %30 = sbr.rel (%p28) target = $region8
    $region5: #{encoder_forward.1} parent=1 // loop_body
      %s32 = ssub.s32 %s27, 1
      %s33 = ssub.s32 %s27, 2
      %s40 = sadd.s32 1, %s35
      %p41 = scmp.ge.s32.totalorder %s40, 2
      %s42 = scalar_select %p41, 0, %s40
      %s43 = sadd.s32 1, %s34
      %s44 = scalar_select %p41, %s43, %s34
      %p45 = scmp.ge.s32.totalorder %s44, 2
      %s46 = scalar_select %p45, 0, %s44
      %s47 = ssub.s32 %s34, %s46
      %p48 = scmp.eq.s32.totalorder %s47, 0
      %s50 = sadd.s32 %s49, 1
      %s51 = scalar_select %p48, %s49, %s50
      %p54 = pneg %p48
      %p55 = scmp.eq.s32.totalorder %s27, 3
      %p56 = por %p54, %p55
      %p57 = scmp.ne.s32.totalorder %s49, %s52
      %p58 = scmp.eq.s32.totalorder %s27, 0
      %p59 = por %p57, %p58
      %p60 = scmp.ne.s32.totalorder %s49, %s52
      %p61 = scmp.eq.s32.totalorder %s32, 3
      %p62 = por %p60, %p61
      %p63 = scmp.ne.s32.totalorder %s52, %s53
      %p64 = scmp.eq.s32.totalorder %s32, 0
      %p65 = por %p63, %p64
      %p66 = scmp.ne.s32.totalorder %s52, %s53
      %p67 = scmp.eq.s32.totalorder %s33, 3
      %p68 = por %p66, %p67
      %p70 = scmp.ne.s32.totalorder %s53, %s69
      %p71 = scmp.eq.s32.totalorder %s33, 0
      %p72 = por %p70, %p71
      %s73 = ssub.s32 %s34, %s46
      %p74 = scmp.eq.s32.totalorder %s73, 0
      %s76 = sadd.s32 %s75, 1
      %s77 = scalar_select %p74, %s75, %s76
      %p80 = pneg %p74
      %p81 = scmp.eq.s32.totalorder %s27, 3
      %p82 = por %p80, %p81
      %p83 = scmp.ne.s32.totalorder %s75, %s78
      %p84 = scmp.eq.s32.totalorder %s27, 0
      %p85 = por %p83, %p84
      %p86 = scmp.ne.s32.totalorder %s75, %s78
      %p87 = scmp.eq.s32.totalorder %s32, 3
      %p88 = por %p86, %p87
      %p89 = scmp.ne.s32.totalorder %s78, %s79
      %p90 = scmp.eq.s32.totalorder %s32, 0
      %p91 = por %p89, %p90
      %p92 = scmp.ne.s32.totalorder %s78, %s79
      %p93 = scmp.eq.s32.totalorder %s33, 3
      %p94 = por %p92, %p93
      %p96 = scmp.ne.s32.totalorder %s79, %s95
      %p97 = scmp.eq.s32.totalorder %s33, 0
      %p98 = por %p96, %p97
      %s99 = ssub.s32 %s34, %s46
      %p100 = scmp.eq.s32.totalorder %s99, 0
      %s102 = sadd.s32 %s101, 1
      %s103 = scalar_select %p100, %s101, %s102
      %p106 = pneg %p100
      %p107 = scmp.eq.s32.totalorder %s27, 3
      %p108 = por %p106, %p107
      %p109 = scmp.ne.s32.totalorder %s101, %s104
      %p110 = scmp.eq.s32.totalorder %s27, 0
      %p111 = por %p109, %p110
      %p112 = scmp.ne.s32.totalorder %s101, %s104
      %p113 = scmp.eq.s32.totalorder %s32, 3
      %p114 = por %p112, %p113
      %p115 = scmp.ne.s32.totalorder %s104, %s105
      %p116 = scmp.eq.s32.totalorder %s32, 0
      %p117 = por %p115, %p116
      %p118 = scmp.ne.s32.totalorder %s104, %s105
      %p119 = scmp.eq.s32.totalorder %s33, 3
      %p120 = por %p118, %p119
      %p122 = scmp.ne.s32.totalorder %s105, %s121
      %p123 = scmp.eq.s32.totalorder %s33, 0
      %p124 = por %p122, %p123
      %s125 = ssub.s32 %s34, %s46
      %p126 = scmp.eq.s32.totalorder %s125, 0
      %s128 = sadd.s32 %s127, 1
      %s129 = scalar_select %p126, %s127, %s128
      %p132 = pneg %p126
      %p133 = scmp.eq.s32.totalorder %s27, 3
      %p134 = por %p132, %p133
      %p135 = scmp.ne.s32.totalorder %s127, %s130
      %p136 = scmp.eq.s32.totalorder %s27, 0
      %p137 = por %p135, %p136
      %p138 = scmp.ne.s32.totalorder %s127, %s130
      %p139 = scmp.eq.s32.totalorder %s32, 3
      %p140 = por %p138, %p139
      %p141 = scmp.ne.s32.totalorder %s130, %s131
      %p142 = scmp.eq.s32.totalorder %s32, 0
      %p143 = por %p141, %p142
      %p144 = scmp.ne.s32.totalorder %s130, %s131
      %p145 = scmp.eq.s32.totalorder %s33, 3
      %p146 = por %p144, %p145
      %p148 = scmp.ne.s32.totalorder %s131, %s147
      %p149 = scmp.eq.s32.totalorder %s33, 0
      %p150 = por %p148, %p149
      %s152 = sadd.s32 %s151, 1
      %p155 = scmp.eq.s32.totalorder %s27, 3
      %p156 = scmp.ne.s32.totalorder %s151, %s153
      %p157 = scmp.eq.s32.totalorder %s27, 0
      %p158 = por %p156, %p157
      %p159 = scmp.ne.s32.totalorder %s151, %s153
      %p160 = scmp.eq.s32.totalorder %s32, 3
      %p161 = por %p159, %p160
      %p162 = scmp.ne.s32.totalorder %s153, %s154
      %p163 = scmp.eq.s32.totalorder %s32, 0
      %p164 = por %p162, %p163
      %p165 = scmp.ne.s32.totalorder %s153, %s154
      %p166 = scmp.eq.s32.totalorder %s33, 3
      %p167 = por %p165, %p166
      %p169 = scmp.ne.s32.totalorder %s154, %s168
      %p170 = scmp.eq.s32.totalorder %s33, 0
      %p171 = por %p169, %p170
      %s173 = sadd.s32 %s172, 1
      %p176 = scmp.eq.s32.totalorder %s27, 3
      %p177 = scmp.ne.s32.totalorder %s172, %s174
      %p178 = scmp.eq.s32.totalorder %s27, 0
      %p179 = por %p177, %p178
      %p180 = scmp.ne.s32.totalorder %s172, %s174
      %p181 = scmp.eq.s32.totalorder %s32, 3
      %p182 = por %p180, %p181
      %p183 = scmp.ne.s32.totalorder %s174, %s175
      %p184 = scmp.eq.s32.totalorder %s32, 0
      %p185 = por %p183, %p184
      %p186 = scmp.ne.s32.totalorder %s174, %s175
      %p187 = scmp.eq.s32.totalorder %s33, 3
      %p188 = por %p186, %p187
      %p190 = scmp.ne.s32.totalorder %s175, %s189
      %p191 = scmp.eq.s32.totalorder %s33, 0
      %p192 = por %p190, %p191
      %s193 = ssub.s32 %s35, %s42
      %p194 = scmp.eq.s32.totalorder %s193, 0
      %s196 = sadd.s32 %s195, 1
      %s197 = scalar_select %p194, %s195, %s196
      %p200 = pneg %p194
      %p201 = scmp.eq.s32.totalorder %s27, 3
      %p202 = por %p200, %p201
      %p203 = scmp.ne.s32.totalorder %s195, %s198
      %p204 = scmp.eq.s32.totalorder %s27, 0
      %p205 = por %p203, %p204
      %p206 = scmp.ne.s32.totalorder %s195, %s198
      %p207 = scmp.eq.s32.totalorder %s32, 3
      %p208 = por %p206, %p207
      %p209 = scmp.ne.s32.totalorder %s198, %s199
      %p210 = scmp.eq.s32.totalorder %s32, 0
      %p211 = por %p209, %p210
      %p212 = scmp.ne.s32.totalorder %s198, %s199
      %p213 = scmp.eq.s32.totalorder %s33, 3
      %p214 = por %p212, %p213
      %p216 = scmp.ne.s32.totalorder %s199, %s215
      %p217 = scmp.eq.s32.totalorder %s33, 0
      %p218 = por %p216, %p217
      %s219 = ssub.s32 %s35, %s42
      %p220 = scmp.eq.s32.totalorder %s219, 0
      %s222 = sadd.s32 %s221, 1
      %s223 = scalar_select %p220, %s221, %s222
      %p226 = pneg %p220
      %p227 = scmp.eq.s32.totalorder %s27, 3
      %p228 = por %p226, %p227
      %p229 = scmp.ne.s32.totalorder %s221, %s224
      %p230 = scmp.eq.s32.totalorder %s27, 0
      %p231 = por %p229, %p230
      %p232 = scmp.ne.s32.totalorder %s221, %s224
      %p233 = scmp.eq.s32.totalorder %s32, 3
      %p234 = por %p232, %p233
      %p235 = scmp.ne.s32.totalorder %s224, %s225
      %p236 = scmp.eq.s32.totalorder %s32, 0
      %p237 = por %p235, %p236
      %p238 = scmp.ne.s32.totalorder %s224, %s225
      %p239 = scmp.eq.s32.totalorder %s33, 3
      %p240 = por %p238, %p239
      %p242 = scmp.ne.s32.totalorder %s225, %s241
      %p243 = scmp.eq.s32.totalorder %s33, 0
      %p244 = por %p242, %p243
      %s245 = ssub.s32 %s35, %s42
      %p246 = scmp.eq.s32.totalorder %s245, 0
      %s248 = sadd.s32 %s247, 1
      %s249 = scalar_select %p246, %s247, %s248
      %p252 = pneg %p246
      %p253 = scmp.eq.s32.totalorder %s27, 3
      %p254 = por %p252, %p253
      %p255 = scmp.ne.s32.totalorder %s247, %s250
      %p256 = scmp.eq.s32.totalorder %s27, 0
      %p257 = por %p255, %p256
      %p258 = scmp.ne.s32.totalorder %s247, %s250
      %p259 = scmp.eq.s32.totalorder %s32, 3
      %p260 = por %p258, %p259
      %p261 = scmp.ne.s32.totalorder %s250, %s251
      %p262 = scmp.eq.s32.totalorder %s32, 0
      %p263 = por %p261, %p262
      %p264 = scmp.ne.s32.totalorder %s250, %s251
      %p265 = scmp.eq.s32.totalorder %s33, 3
      %p266 = por %p264, %p265
      %p268 = scmp.ne.s32.totalorder %s251, %s267
      %p269 = scmp.eq.s32.totalorder %s33, 0
      %p270 = por %p268, %p269
      %s271 = ssub.s32 %s35, %s42
      %p272 = scmp.eq.s32.totalorder %s271, 0
      %s274 = sadd.s32 %s273, 1
      %s275 = scalar_select %p272, %s273, %s274
      %p278 = pneg %p272
      %p279 = scmp.eq.s32.totalorder %s27, 3
      %p280 = por %p278, %p279
      %p281 = scmp.ne.s32.totalorder %s273, %s276
      %p282 = scmp.eq.s32.totalorder %s27, 0
      %p283 = por %p281, %p282
      %p284 = scmp.ne.s32.totalorder %s273, %s276
      %p285 = scmp.eq.s32.totalorder %s32, 3
      %p286 = por %p284, %p285
      %p287 = scmp.ne.s32.totalorder %s276, %s277
      %p288 = scmp.eq.s32.totalorder %s32, 0
      %p289 = por %p287, %p288
      %p290 = scmp.ne.s32.totalorder %s276, %s277
      %p291 = scmp.eq.s32.totalorder %s33, 3
      %p292 = por %p290, %p291
      %p294 = scmp.ne.s32.totalorder %s277, %s293
      %p295 = scmp.eq.s32.totalorder %s33, 0
      %p296 = por %p294, %p295
      %s297 = ssub.s32 %s35, %s42
      %p298 = scmp.eq.s32.totalorder %s297, 0
      %s300 = sadd.s32 %s299, 1
      %s301 = scalar_select %p298, %s299, %s300
      %p304 = pneg %p298
      %p305 = scmp.eq.s32.totalorder %s27, 3
      %p306 = por %p304, %p305
      %p307 = scmp.ne.s32.totalorder %s299, %s302
      %p308 = scmp.eq.s32.totalorder %s27, 0
      %p309 = por %p307, %p308
      %p310 = scmp.ne.s32.totalorder %s299, %s302
      %p311 = scmp.eq.s32.totalorder %s32, 3
      %p312 = por %p310, %p311
      %p313 = scmp.ne.s32.totalorder %s302, %s303
      %p314 = scmp.eq.s32.totalorder %s32, 0
      %p315 = por %p313, %p314
      %p316 = scmp.ne.s32.totalorder %s302, %s303
      %p317 = scmp.eq.s32.totalorder %s33, 3
      %p318 = por %p316, %p317
      %p320 = scmp.ne.s32.totalorder %s303, %s319
      %p321 = scmp.eq.s32.totalorder %s33, 0
      %p322 = por %p320, %p321
      %s323 = ssub.s32 %s35, %s42
      %p324 = scmp.eq.s32.totalorder %s323, 0
      %s326 = sadd.s32 %s325, 1
      %s327 = scalar_select %p324, %s325, %s326
      %p330 = pneg %p324
      %p331 = scmp.eq.s32.totalorder %s27, 3
      %p332 = por %p330, %p331
      %p333 = scmp.ne.s32.totalorder %s325, %s328
      %p334 = scmp.eq.s32.totalorder %s27, 0
      %p335 = por %p333, %p334
      %p336 = scmp.ne.s32.totalorder %s325, %s328
      %p337 = scmp.eq.s32.totalorder %s32, 3
      %p338 = por %p336, %p337
      %p339 = scmp.ne.s32.totalorder %s328, %s329
      %p340 = scmp.eq.s32.totalorder %s32, 0
      %p341 = por %p339, %p340
      %p342 = scmp.ne.s32.totalorder %s328, %s329
      %p343 = scmp.eq.s32.totalorder %s33, 3
      %p344 = por %p342, %p343
      %p346 = scmp.ne.s32.totalorder %s329, %s345
      %p347 = scmp.eq.s32.totalorder %s33, 0
      %p348 = por %p346, %p347
      %s349 = ssub.s32 %s35, %s42
      %p350 = scmp.eq.s32.totalorder %s349, 0
      %s352 = sadd.s32 %s351, 1
      %s353 = scalar_select %p350, %s351, %s352
      %p356 = pneg %p350
      %p357 = scmp.eq.s32.totalorder %s27, 3
      %p358 = por %p356, %p357
      %p359 = scmp.ne.s32.totalorder %s351, %s354
      %p360 = scmp.eq.s32.totalorder %s27, 0
      %p361 = por %p359, %p360
      %p362 = scmp.ne.s32.totalorder %s351, %s354
      %p363 = scmp.eq.s32.totalorder %s32, 3
      %p364 = por %p362, %p363
      %p365 = scmp.ne.s32.totalorder %s354, %s355
      %p366 = scmp.eq.s32.totalorder %s32, 0
      %p367 = por %p365, %p366
      %p368 = scmp.ne.s32.totalorder %s354, %s355
      %p369 = scmp.eq.s32.totalorder %s33, 3
      %p370 = por %p368, %p369
      %p372 = scmp.ne.s32.totalorder %s355, %s371
      %p373 = scmp.eq.s32.totalorder %s33, 0
      %p374 = por %p372, %p373
      %s375 = ssub.s32 %s35, %s42
      %p376 = scmp.eq.s32.totalorder %s375, 0
      %s378 = sadd.s32 %s377, 1
      %s379 = scalar_select %p376, %s377, %s378
      %p382 = pneg %p376
      %p383 = scmp.eq.s32.totalorder %s27, 3
      %p384 = por %p382, %p383
      %p385 = scmp.ne.s32.totalorder %s377, %s380
      %p386 = scmp.eq.s32.totalorder %s27, 0
      %p387 = por %p385, %p386
      %p388 = scmp.ne.s32.totalorder %s377, %s380
      %p389 = scmp.eq.s32.totalorder %s32, 3
      %p390 = por %p388, %p389
      %p391 = scmp.ne.s32.totalorder %s380, %s381
      %p392 = scmp.eq.s32.totalorder %s32, 0
      %p393 = por %p391, %p392
      %p394 = scmp.ne.s32.totalorder %s380, %s381
      %p395 = scmp.eq.s32.totalorder %s33, 3
      %p396 = por %p394, %p395
      %p398 = scmp.ne.s32.totalorder %s381, %s397
      %p399 = scmp.eq.s32.totalorder %s33, 0
      %p400 = por %p398, %p399
      %s401 = ssub.s32 %s35, %s42
      %p402 = scmp.eq.s32.totalorder %s401, 0
      %s404 = sadd.s32 %s403, 1
      %s405 = scalar_select %p402, %s403, %s404
      %p408 = pneg %p402
      %p409 = scmp.eq.s32.totalorder %s27, 3
      %p410 = por %p408, %p409
      %p411 = scmp.ne.s32.totalorder %s403, %s406
      %p412 = scmp.eq.s32.totalorder %s27, 0
      %p413 = por %p411, %p412
      %p414 = scmp.ne.s32.totalorder %s403, %s406
      %p415 = scmp.eq.s32.totalorder %s32, 3
      %p416 = por %p414, %p415
      %p417 = scmp.ne.s32.totalorder %s406, %s407
      %p418 = scmp.eq.s32.totalorder %s32, 0
      %p419 = por %p417, %p418
      %p420 = scmp.ne.s32.totalorder %s406, %s407
      %p421 = scmp.eq.s32.totalorder %s33, 3
      %p422 = por %p420, %p421
      %p424 = scmp.ne.s32.totalorder %s407, %s423
      %p425 = scmp.eq.s32.totalorder %s33, 0
      %p426 = por %p424, %p425
      %s427 = ssub.s32 %s35, %s42
      %p428 = scmp.eq.s32.totalorder %s427, 0
      %s430 = sadd.s32 %s429, 1
      %s431 = scalar_select %p428, %s429, %s430
      %p434 = pneg %p428
      %p435 = scmp.eq.s32.totalorder %s27, 3
      %p436 = por %p434, %p435
      %p437 = scmp.ne.s32.totalorder %s429, %s432
      %p438 = scmp.eq.s32.totalorder %s27, 0
      %p439 = por %p437, %p438
      %p440 = scmp.ne.s32.totalorder %s429, %s432
      %p441 = scmp.eq.s32.totalorder %s32, 3
      %p442 = por %p440, %p441
      %p443 = scmp.ne.s32.totalorder %s432, %s433
      %p444 = scmp.eq.s32.totalorder %s32, 0
      %p445 = por %p443, %p444
      %p446 = scmp.ne.s32.totalorder %s432, %s433
      %p447 = scmp.eq.s32.totalorder %s33, 3
      %p448 = por %p446, %p447
      %p450 = scmp.ne.s32.totalorder %s433, %s449
      %p451 = scmp.eq.s32.totalorder %s33, 0
      %p452 = por %p450, %p451
      %s453 = ssub.s32 %s35, %s42
      %p454 = scmp.eq.s32.totalorder %s453, 0
      %s456 = sadd.s32 %s455, 1
      %s457 = scalar_select %p454, %s455, %s456
      %p460 = pneg %p454
      %p461 = scmp.eq.s32.totalorder %s27, 3
      %p462 = por %p460, %p461
      %p463 = scmp.ne.s32.totalorder %s455, %s458
      %p464 = scmp.eq.s32.totalorder %s27, 0
      %p465 = por %p463, %p464
      %p466 = scmp.ne.s32.totalorder %s455, %s458
      %p467 = scmp.eq.s32.totalorder %s32, 3
      %p468 = por %p466, %p467
      %p469 = scmp.ne.s32.totalorder %s458, %s459
      %p470 = scmp.eq.s32.totalorder %s32, 0
      %p471 = por %p469, %p470
      %p472 = scmp.ne.s32.totalorder %s458, %s459
      %p473 = scmp.eq.s32.totalorder %s33, 3
      %p474 = por %p472, %p473
      %p476 = scmp.ne.s32.totalorder %s459, %s475
      %p477 = scmp.eq.s32.totalorder %s33, 0
      %p478 = por %p476, %p477
      %s479 = ssub.s32 %s35, %s42
      %p480 = scmp.eq.s32.totalorder %s479, 0
      %s482 = sadd.s32 %s481, 1
      %s483 = scalar_select %p480, %s481, %s482
      %p486 = pneg %p480
      %p487 = scmp.eq.s32.totalorder %s27, 3
      %p488 = por %p486, %p487
      %p489 = scmp.ne.s32.totalorder %s481, %s484
      %p490 = scmp.eq.s32.totalorder %s27, 0
      %p491 = por %p489, %p490
      %p492 = scmp.ne.s32.totalorder %s481, %s484
      %p493 = scmp.eq.s32.totalorder %s32, 3
      %p494 = por %p492, %p493
      %p495 = scmp.ne.s32.totalorder %s484, %s485
      %p496 = scmp.eq.s32.totalorder %s32, 0
      %p497 = por %p495, %p496
      %p498 = scmp.ne.s32.totalorder %s484, %s485
      %p499 = scmp.eq.s32.totalorder %s33, 3
      %p500 = por %p498, %p499
      %p502 = scmp.ne.s32.totalorder %s485, %s501
      %p503 = scmp.eq.s32.totalorder %s33, 0
      %p504 = por %p502, %p503
      %s505 = ssub.s32 %s34, %s46
      %p506 = scmp.eq.s32.totalorder %s505, 0
      %s508 = sadd.s32 %s507, 1
      %s509 = scalar_select %p506, %s507, %s508
      %p512 = pneg %p506
      %p513 = scmp.eq.s32.totalorder %s27, 3
      %p514 = por %p512, %p513
      %p515 = scmp.ne.s32.totalorder %s507, %s510
      %p516 = scmp.eq.s32.totalorder %s27, 0
      %p517 = por %p515, %p516
      %p518 = scmp.ne.s32.totalorder %s507, %s510
      %p519 = scmp.eq.s32.totalorder %s32, 3
      %p520 = por %p518, %p519
      %p521 = scmp.ne.s32.totalorder %s510, %s511
      %p522 = scmp.eq.s32.totalorder %s32, 0
      %p523 = por %p521, %p522
      %p524 = scmp.ne.s32.totalorder %s510, %s511
      %p525 = scmp.eq.s32.totalorder %s33, 3
      %p526 = por %p524, %p525
      %p528 = scmp.ne.s32.totalorder %s511, %s527
      %p529 = scmp.eq.s32.totalorder %s33, 0
      %p530 = por %p528, %p529
      %p531 = scmp.le.s32.totalorder 1, %s27
      %p532 = scmp.lt.s32.totalorder %s27, 5
      %p533 = pnand %p531, %p532
      %p534 = pneg %p533
      // Predicated region
      $region9: #{encoder_forward.1} parent=5 // pred_check
        _
      $region10: #{encoder_forward.1} parent=5 // pred_check_branch
        %536 = sbr.rel (%p533) target = $region12
      $region11: #{encoder_forward.1} parent=5 // pred_region
        %s537 = ssub.s32 %s27, 1
        // Predicated region
        $region13: #{encoder_forward.1} parent=11 // pred_check
          %p538 = pneg %p164
        $region14: #{encoder_forward.1} parent=11 // pred_check_branch
          %540 = sbr.rel (%p538) target = $region16
        $region15: #{encoder_forward.1} parent=11 // pred_region
          _
        $region16: #{encoder_forward.1} parent=11 // pred_fallthru
          _
        // Predicated region
        $region17: #{encoder_forward.1} parent=11 // pred_check
          %p541 = pneg %p185
        $region18: #{encoder_forward.1} parent=11 // pred_check_branch
          %543 = sbr.rel (%p541) target = $region20
        $region19: #{encoder_forward.1} parent=11 // pred_region
          _
        $region20: #{encoder_forward.1} parent=11 // pred_fallthru
          _
      $region12: #{encoder_forward.1} parent=5 // pred_fallthru
        _
      %p544 = scmp.lt.s32.totalorder %s27, 4
      // Predicated region
      $region21: #{encoder_forward.1} parent=5 // pred_check
        %p545 = pneg %p544
      $region22: #{encoder_forward.1} parent=5 // pred_check_branch
        %547 = sbr.rel (%p545) target = $region24
      $region23: #{encoder_forward.1} parent=5 // pred_region
        // Predicated region
        $region25: #{encoder_forward.1} parent=23 // pred_check
          %p548 = pneg %p59
        $region26: #{encoder_forward.1} parent=23 // pred_check_branch
          %550 = sbr.rel (%p548) target = $region28
        $region27: #{encoder_forward.1} parent=23 // pred_region
          %p551 = scmp.lt.s32.totalorder %s34, 1
          %s552 = scalar_select %p551, %s34, 1
          %s553 = scalar_lea.vmem %s0, %s552
        $region28: #{encoder_forward.1} parent=23 // pred_fallthru
          _
        // Predicated region
        $region29: #{encoder_forward.1} parent=23 // pred_check
          %p554 = pneg %p85
        $region30: #{encoder_forward.1} parent=23 // pred_check_branch
          %556 = sbr.rel (%p554) target = $region32
        $region31: #{encoder_forward.1} parent=23 // pred_region
          %p557 = scmp.lt.s32.totalorder %s34, 1
          %s558 = scalar_select %p557, %s34, 1
          %s559 = smul.addr %s558, 8
          %s560 = scalar_lea.vmem %s1, %s559
        $region32: #{encoder_forward.1} parent=23 // pred_fallthru
          _
        // Predicated region
        $region33: #{encoder_forward.1} parent=23 // pred_check
          %p561 = pneg %p111
        $region34: #{encoder_forward.1} parent=23 // pred_check_branch
          %563 = sbr.rel (%p561) target = $region36
        $region35: #{encoder_forward.1} parent=23 // pred_region
          %p564 = scmp.lt.s32.totalorder %s34, 1
          %s565 = scalar_select %p564, %s34, 1
          %s566 = smul.addr %s565, 8
          %s567 = scalar_lea.vmem %s2, %s566
        $region36: #{encoder_forward.1} parent=23 // pred_fallthru
          _
        // Predicated region
        $region37: #{encoder_forward.1} parent=23 // pred_check
          %p568 = pneg %p137
        $region38: #{encoder_forward.1} parent=23 // pred_check_branch
          %570 = sbr.rel (%p568) target = $region40
        $region39: #{encoder_forward.1} parent=23 // pred_region
          %p571 = scmp.lt.s32.totalorder %s34, 1
          %s572 = scalar_select %p571, %s34, 1
          %s573 = smul.addr %s572, 8
          %s574 = scalar_lea.vmem %s3, %s573
        $region40: #{encoder_forward.1} parent=23 // pred_fallthru
          _
        // Predicated region
        $region41: #{encoder_forward.1} parent=23 // pred_check
          %p575 = pneg %p205
        $region42: #{encoder_forward.1} parent=23 // pred_check_branch
          %577 = sbr.rel (%p575) target = $region44
        $region43: #{encoder_forward.1} parent=23 // pred_region
          %p578 = scmp.lt.s32.totalorder %s35, 1
          %s579 = scalar_select %p578, %s35, 1
          %s580 = smul.addr %s579, 4
          %s581 = smul.addr %s580, 4
          %s582 = scalar_lea.vmem %s6, %s581
        $region44: #{encoder_forward.1} parent=23 // pred_fallthru
          _
        // Predicated region
        $region45: #{encoder_forward.1} parent=23 // pred_check
          %p583 = pneg %p231
        $region46: #{encoder_forward.1} parent=23 // pred_check_branch
          %585 = sbr.rel (%p583) target = $region48
        $region47: #{encoder_forward.1} parent=23 // pred_region
          %p586 = scmp.lt.s32.totalorder %s35, 1
          %s587 = scalar_select %p586, %s35, 1
          %s588 = scalar_lea.vmem %s7, %s587
        $region48: #{encoder_forward.1} parent=23 // pred_fallthru
          _
        // Predicated region
        $region49: #{encoder_forward.1} parent=23 // pred_check
          %p589 = pneg %p257
        $region50: #{encoder_forward.1} parent=23 // pred_check_branch
          %591 = sbr.rel (%p589) target = $region52
        $region51: #{encoder_forward.1} parent=23 // pred_region
          %p592 = scmp.lt.s32.totalorder %s35, 1
          %s593 = scalar_select %p592, %s35, 1
          %s594 = smul.addr %s593, 4
          %s595 = smul.addr %s594, 4
          %s596 = scalar_lea.vmem %s8, %s595
        $region52: #{encoder_forward.1} parent=23 // pred_fallthru
          _
        // Predicated region
        $region53: #{encoder_forward.1} parent=23 // pred_check
          %p597 = pneg %p283
        $region54: #{encoder_forward.1} parent=23 // pred_check_branch
          %599 = sbr.rel (%p597) target = $region56
        $region55: #{encoder_forward.1} parent=23 // pred_region
          %p600 = scmp.lt.s32.totalorder %s35, 1
          %s601 = scalar_select %p600, %s35, 1
          %s602 = scalar_lea.vmem %s9, %s601
        $region56: #{encoder_forward.1} parent=23 // pred_fallthru
          _
        // Predicated region
        $region57: #{encoder_forward.1} parent=23 // pred_check
          %p603 = pneg %p309
        $region58: #{encoder_forward.1} parent=23 // pred_check_branch
          %605 = sbr.rel (%p603) target = $region60
        $region59: #{encoder_forward.1} parent=23 // pred_region
          %p606 = scmp.lt.s32.totalorder %s35, 1
          %s607 = scalar_select %p606, %s35, 1
          %s608 = scalar_lea.vmem %s10, %s607
        $region60: #{encoder_forward.1} parent=23 // pred_fallthru
          _
        // Predicated region
        $region61: #{encoder_forward.1} parent=23 // pred_check
          %p609 = pneg %p335
        $region62: #{encoder_forward.1} parent=23 // pred_check_branch
          %611 = sbr.rel (%p609) target = $region64
        $region63: #{encoder_forward.1} parent=23 // pred_region
          %p612 = scmp.lt.s32.totalorder %s35, 1
          %s613 = scalar_select %p612, %s35, 1
          %s614 = scalar_lea.vmem %s11, %s613
        $region64: #{encoder_forward.1} parent=23 // pred_fallthru
          _
        // Predicated region
        $region65: #{encoder_forward.1} parent=23 // pred_check
          %p615 = pneg %p361
        $region66: #{encoder_forward.1} parent=23 // pred_check_branch
          %617 = sbr.rel (%p615) target = $region68
        $region67: #{encoder_forward.1} parent=23 // pred_region
          %p618 = scmp.lt.s32.totalorder %s35, 1
          %s619 = scalar_select %p618, %s35, 1
          %s620 = smul.addr %s619, 4
          %s621 = smul.addr %s620, 4
          %s622 = scalar_lea.vmem %s12, %s621
        $region68: #{encoder_forward.1} parent=23 // pred_fallthru
          _
        // Predicated region
        $region69: #{encoder_forward.1} parent=23 // pred_check
          %p623 = pneg %p387
        $region70: #{encoder_forward.1} parent=23 // pred_check_branch
          %625 = sbr.rel (%p623) target = $region72
        $region71: #{encoder_forward.1} parent=23 // pred_region
          %p626 = scmp.lt.s32.totalorder %s35, 1
          %s627 = scalar_select %p626, %s35, 1
          %s628 = scalar_lea.vmem %s13, %s627
        $region72: #{encoder_forward.1} parent=23 // pred_fallthru
          _
        // Predicated region
        $region73: #{encoder_forward.1} parent=23 // pred_check
          %p629 = pneg %p413
        $region74: #{encoder_forward.1} parent=23 // pred_check_branch
          %631 = sbr.rel (%p629) target = $region76
        $region75: #{encoder_forward.1} parent=23 // pred_region
          %p632 = scmp.lt.s32.totalorder %s35, 1
          %s633 = scalar_select %p632, %s35, 1
          %s634 = smul.addr %s633, 8
          %s635 = smul.addr %s634, 4
          %s636 = scalar_lea.vmem %s14, %s635
        $region76: #{encoder_forward.1} parent=23 // pred_fallthru
          _
        // Predicated region
        $region77: #{encoder_forward.1} parent=23 // pred_check
          %p637 = pneg %p439
        $region78: #{encoder_forward.1} parent=23 // pred_check_branch
          %639 = sbr.rel (%p637) target = $region80
        $region79: #{encoder_forward.1} parent=23 // pred_region
          %p640 = scmp.lt.s32.totalorder %s35, 1
          %s641 = scalar_select %p640, %s35, 1
          %s642 = scalar_lea.vmem %s15, %s641
        $region80: #{encoder_forward.1} parent=23 // pred_fallthru
          _
        // Predicated region
        $region81: #{encoder_forward.1} parent=23 // pred_check
          %p643 = pneg %p465
        $region82: #{encoder_forward.1} parent=23 // pred_check_branch
          %645 = sbr.rel (%p643) target = $region84
        $region83: #{encoder_forward.1} parent=23 // pred_region
          %p646 = scmp.lt.s32.totalorder %s35, 1
          %s647 = scalar_select %p646, %s35, 1
          %s648 = scalar_lea.vmem %s16, %s647
        $region84: #{encoder_forward.1} parent=23 // pred_fallthru
          _
        // Predicated region
        $region85: #{encoder_forward.1} parent=23 // pred_check
          %p649 = pneg %p491
        $region86: #{encoder_forward.1} parent=23 // pred_check_branch
          %651 = sbr.rel (%p649) target = $region88
        $region87: #{encoder_forward.1} parent=23 // pred_region
          %p652 = scmp.lt.s32.totalorder %s35, 1
          %s653 = scalar_select %p652, %s35, 1
          %s654 = scalar_lea.vmem %s17, %s653
        $region88: #{encoder_forward.1} parent=23 // pred_fallthru
          _
      $region24: #{encoder_forward.1} parent=5 // pred_fallthru
        _
      %p655 = scmp.le.s32.totalorder 1, %s27
      %p656 = scmp.lt.s32.totalorder %s27, 5
      %p657 = pnand %p655, %p656
      %p658 = pneg %p657
      // Predicated region
      $region89: #{encoder_forward.1} parent=5 // pred_check
        _
      $region90: #{encoder_forward.1} parent=5 // pred_check_branch
        %660 = sbr.rel (%p657) target = $region92
      $region91: #{encoder_forward.1} parent=5 // pred_region
        %s661 = ssub.s32 %s27, 1
        %p662 = scmp.lt.s32.totalorder %s36, 1
        %s663 = scalar_select %p662, %s36, 1
        %s664 = scalar_lea.vmem %s0, %s663
        %p665 = pneg %p65
        %p666 = pneg %p62
        %p667 = scmp.lt.s32.totalorder %s36, 1
        %s668 = scalar_select %p667, %s36, 1
        %s669 = smul.addr %s668, 8
        %s670 = scalar_lea.vmem %s1, %s669
        %p671 = pneg %p91
        %p672 = pneg %p88
        %p673 = scmp.lt.s32.totalorder %s36, 1
        %s674 = scalar_select %p673, %s36, 1
        %s675 = smul.addr %s674, 8
        %s676 = scalar_lea.vmem %s2, %s675
        %p677 = pneg %p117
        %p678 = pneg %p114
        %p679 = scmp.lt.s32.totalorder %s36, 1
        %s680 = scalar_select %p679, %s36, 1
        %s681 = smul.addr %s680, 8
        %s682 = scalar_lea.vmem %s3, %s681
        %p683 = pneg %p143
        %p684 = pneg %p140
        %p685 = pneg %p164
        %p686 = pneg %p161
        %p687 = pneg %p185
        %p688 = pneg %p182
        %p689 = scmp.lt.s32.totalorder %s37, 1
        %s690 = scalar_select %p689, %s37, 1
        %s691 = smul.addr %s690, 4
        %s692 = smul.addr %s691, 4
        %s693 = scalar_lea.vmem %s6, %s692
        %p694 = pneg %p211
        %p695 = pneg %p208
        %p696 = scmp.lt.s32.totalorder %s37, 1
        %s697 = scalar_select %p696, %s37, 1
        %s698 = scalar_lea.vmem %s7, %s697
        %p699 = pneg %p237
        %p700 = pneg %p234
        %p701 = scmp.lt.s32.totalorder %s37, 1
        %s702 = scalar_select %p701, %s37, 1
        %s703 = smul.addr %s702, 4
        %s704 = smul.addr %s703, 4
        %s705 = scalar_lea.vmem %s8, %s704
        %p706 = pneg %p263
        %p707 = pneg %p260
        %p708 = scmp.lt.s32.totalorder %s37, 1
        %s709 = scalar_select %p708, %s37, 1
        %s710 = scalar_lea.vmem %s9, %s709
        %p711 = pneg %p289
        %p712 = pneg %p286
        %p713 = scmp.lt.s32.totalorder %s37, 1
        %s714 = scalar_select %p713, %s37, 1
        %s715 = scalar_lea.vmem %s10, %s714
        %p716 = pneg %p315
        %p717 = pneg %p312
        %p718 = scmp.lt.s32.totalorder %s37, 1
        %s719 = scalar_select %p718, %s37, 1
        %s720 = scalar_lea.vmem %s11, %s719
        %p721 = pneg %p341
        %p722 = pneg %p338
        %p723 = scmp.lt.s32.totalorder %s37, 1
        %s724 = scalar_select %p723, %s37, 1
        %s725 = smul.addr %s724, 4
        %s726 = smul.addr %s725, 4
        %s727 = scalar_lea.vmem %s12, %s726
        %p728 = pneg %p367
        %p729 = pneg %p364
        %p730 = scmp.lt.s32.totalorder %s37, 1
        %s731 = scalar_select %p730, %s37, 1
        %s732 = scalar_lea.vmem %s13, %s731
        %p733 = pneg %p393
        %p734 = pneg %p390
        %p735 = scmp.lt.s32.totalorder %s37, 1
        %s736 = scalar_select %p735, %s37, 1
        %s737 = smul.addr %s736, 8
        %s738 = smul.addr %s737, 4
        %s739 = scalar_lea.vmem %s14, %s738
        %p740 = pneg %p419
        %p741 = pneg %p416
        %p742 = scmp.lt.s32.totalorder %s37, 1
        %s743 = scalar_select %p742, %s37, 1
        %s744 = scalar_lea.vmem %s15, %s743
        %p745 = pneg %p445
        %p746 = pneg %p442
        %p747 = scmp.lt.s32.totalorder %s37, 1
        %s748 = scalar_select %p747, %s37, 1
        %s749 = scalar_lea.vmem %s16, %s748
        %p750 = pneg %p471
        %p751 = pneg %p468
        %p752 = scmp.lt.s32.totalorder %s37, 1
        %s753 = scalar_select %p752, %s37, 1
        %s754 = scalar_lea.vmem %s17, %s753
        %p755 = pneg %p497
        %p756 = pneg %p494
        %p757 = pneg %p523
        %p758 = pneg %p520
        %s759 = sand.u32 %s510, 1
        %s760 = scalar_lea.sflag [#allocation4], %s759
        %s761 = sand.u32 %s510, 1
        %s762 = smul.addr %s761, 8
        %s763 = scalar_lea.vmem [#allocation3], %s762
        %p764 = scmp.lt.s32.totalorder %s36, 1
        %s765 = scalar_select %p764, %s36, 1
        %s766 = scalar_lea.vmem %s0, %s765
        %p767 = scmp.lt.s32.totalorder %s36, 1
        %s768 = scalar_select %p767, %s36, 1
        %s769 = smul.addr %s768, 8
        %s770 = scalar_lea.vmem %s1, %s769
        %p771 = scmp.lt.s32.totalorder %s36, 1
        %s772 = scalar_select %p771, %s36, 1
        %s773 = smul.addr %s772, 8
        %s774 = scalar_lea.vmem %s2, %s773
        %p775 = scmp.lt.s32.totalorder %s36, 1
        %s776 = scalar_select %p775, %s36, 1
        %s777 = smul.addr %s776, 8
        %s778 = scalar_lea.vmem %s3, %s777
        %p779 = scmp.lt.s32.totalorder %s37, 1
        %s780 = scalar_select %p779, %s37, 1
        %s781 = smul.addr %s780, 4
        %s782 = smul.addr %s781, 4
        %s783 = scalar_lea.vmem %s6, %s782
        %p784 = scmp.lt.s32.totalorder %s37, 1
        %s785 = scalar_select %p784, %s37, 1
        %s786 = scalar_lea.vmem %s7, %s785
        %p787 = scmp.lt.s32.totalorder %s37, 1
        %s788 = scalar_select %p787, %s37, 1
        %s789 = smul.addr %s788, 4
        %s790 = smul.addr %s789, 4
        %s791 = scalar_lea.vmem %s8, %s790
        %p792 = scmp.lt.s32.totalorder %s37, 1
        %s793 = scalar_select %p792, %s37, 1
        %s794 = scalar_lea.vmem %s9, %s793
        %p795 = scmp.lt.s32.totalorder %s37, 1
        %s796 = scalar_select %p795, %s37, 1
        %s797 = scalar_lea.vmem %s10, %s796
        %p798 = scmp.lt.s32.totalorder %s37, 1
        %s799 = scalar_select %p798, %s37, 1
        %s800 = scalar_lea.vmem %s11, %s799
        %p801 = scmp.lt.s32.totalorder %s37, 1
        %s802 = scalar_select %p801, %s37, 1
        %s803 = smul.addr %s802, 4
        %s804 = smul.addr %s803, 4
        %s805 = scalar_lea.vmem %s12, %s804
        %p806 = scmp.lt.s32.totalorder %s37, 1
        %s807 = scalar_select %p806, %s37, 1
        %s808 = scalar_lea.vmem %s13, %s807
        %p809 = scmp.lt.s32.totalorder %s37, 1
        %s810 = scalar_select %p809, %s37, 1
        %s811 = smul.addr %s810, 8
        %s812 = smul.addr %s811, 4
        %s813 = scalar_lea.vmem %s14, %s812
        %p814 = scmp.lt.s32.totalorder %s37, 1
        %s815 = scalar_select %p814, %s37, 1
        %s816 = scalar_lea.vmem %s15, %s815
        %p817 = scmp.lt.s32.totalorder %s37, 1
        %s818 = scalar_select %p817, %s37, 1
        %s819 = scalar_lea.vmem %s16, %s818
        %p820 = scmp.lt.s32.totalorder %s37, 1
        %s821 = scalar_select %p820, %s37, 1
        %s822 = scalar_lea.vmem %s17, %s821
        %p824 = scmp.eq.s32.totalorder %s37, 0
        // Predicated region
        $region93: #{encoder_forward.1} parent=91 // pred_check
          %p825 = pneg %p824
        $region94: #{encoder_forward.1} parent=91 // pred_check_branch
          %827 = sbr.rel (%p825) target = $region96
        $region95: #{encoder_forward.1} parent=91 // pred_region
          %v828 = vld [vmem:[%s774] sm:$0xff]
          %v829 = vld [vmem:[%s778] sm:$0xff]
          %v830 = vpack.c.bf16 %v828, %v828
          %v831 = vld [vmem:[%s4] sm:$0x3]
          %v832 = vld [vmem:[%s5] sm:$0x1]
          %v834 = vlaneseq
          %v835 = vshrl.u32 %v834, 7
          %v836 = vsub.s32 0, %v835
          %v837 = vrot.slane %v832, %v836
          %vm839 = vcmask 31744
          %v841 = vsel %vm839, %v830, 0
          %vm843 = vcmask 1041408
          %v845 = vsel %vm843, %v831, 0
          %847 = vmatprep.subr.bf16.mxu0 0
          %848 = vmatpush1.bf16.msra.mxu0 %v845
          %849 = vmatprep.subr.bf16.mxu0 0
          %850 = vmatpush1.bf16.msra.mxu0 0
          %851 = vmatprep.subr.bf16.mxu0 0
          %852 = vmatpush1.bf16.msra.mxu0 0
          %853 = vmatprep.subr.bf16.mxu0 0
          %854 = vmatpush1.bf16.msra.mxu0 0
          %855 = vmatprep.subr.bf16.mxu0 0
          %856 = vmatpush1.bf16.msra.mxu0 0
          %857 = vmatprep.subr.bf16.mxu0 0
          %858 = vmatpush1.bf16.msra.mxu0 0
          %859 = vmatprep.subr.bf16.mxu0 0
          %860 = vmatpush1.bf16.msra.mxu0 0
          %861 = vmatprep.subr.bf16.mxu0 0
          %862 = vmatpush1.bf16.msra.mxu0 0
          %863 = vmatprep.subr.bf16.mxu0 0
          %864 = vmatpush1.bf16.msra.mxu0 0
          %865 = vmatprep.subr.bf16.mxu0 0
          %866 = vmatpush1.bf16.msra.mxu0 0
          %867 = vmatprep.subr.bf16.mxu0 0
          %868 = vmatpush1.bf16.msra.mxu0 0
          %869 = vmatprep.subr.bf16.mxu0 0
          %870 = vmatpush1.bf16.msra.mxu0 0
          %871 = vmatprep.subr.bf16.mxu0 0
          %872 = vmatpush1.bf16.msra.mxu0 0
          %873 = vmatprep.subr.bf16.mxu0 0
          %874 = vmatpush1.bf16.msra.mxu0 0
          %875 = vmatprep.subr.bf16.mxu0 0
          %876 = vmatpush1.bf16.msra.mxu0 0
          %877 = vmatprep.subr.bf16.mxu0 0
          %878 = vmatpush1.bf16.msra.mxu0 0
          %879 = vmatprep.mubr.bf16.mxu0 0
          %880 = vmatmul.mubr.bf16.gmra.mrb[0].mxu0 %v841
          %v881 = vpop.f32.mrb[0].mxu0
          %v882 = vadd.f32 %v837, %v881
          %v883 = vpop.f32.mrb[0].mxu0
          %v884 = vpop.f32.mrb[0].mxu0
          %v885 = vpop.f32.mrb[0].mxu0
          %886 = vdwg.mxu0
          %v887 = vadd.f32 %v882, %v829
          %vm888 = vcmask 261120
          %889 = vst.msk [vmem:[#allocation2] sm:$0xff] %vm888, %v887
        $region96: #{encoder_forward.1} parent=91 // pred_fallthru
          _
        %v890 = vld [vmem:[#allocation2] sm:$0xff]
        %v891 = vld [vmem:[%s770] sm:$0xff]
        %v892 = vpack.c.bf16 %v890, %v890
        %v893 = vld [vmem:[%s783] sm:$0xf]
        %v894 = vld [vmem:[%s783 + $0x4] sm:$0xf]
        %v895 = vld [vmem:[%s783 + $0x8] sm:$0xf]
        %v896 = vld [vmem:[%s783 + $0xc] sm:$0xf]
        %v897 = vld [vmem:[%s786] sm:$0x1]
        %v899 = vlaneseq
        %v900 = vshrl.u32 %v899, 7
        %v901 = vsub.s32 0, %v900
        %v902 = vrot.slane %v897, %v901
        %v908 = vunpack.c.l.b16 %v893
        %v909 = vunpack.c.l.b16 %v894
        %v910 = vunpack.c.l.b16 %v895
        %v911 = vunpack.c.l.b16 %v896
        %v912 = vpack.c.b16 %v909, %v908
        %v913 = vpack.c.b16 %v911, %v910
        %vm916 = vcmask 261120
        %v918 = vsel %vm916, %v892, 0
        %920 = vmatprep.subr.bf16.mxu0 0
        %921 = vmatpush1.bf16.msra.mxu0 %v912
        %922 = vmatprep.subr.bf16.mxu0 0
        %923 = vmatpush1.bf16.msra.mxu0 %v913
        %924 = vmatprep.subr.bf16.mxu0 0
        %925 = vmatpush1.bf16.msra.mxu0 0
        %926 = vmatprep.subr.bf16.mxu0 0
        %927 = vmatpush1.bf16.msra.mxu0 0
        %928 = vmatprep.subr.bf16.mxu0 0
        %929 = vmatpush1.bf16.msra.mxu0 0
        %930 = vmatprep.subr.bf16.mxu0 0
        %931 = vmatpush1.bf16.msra.mxu0 0
        %932 = vmatprep.subr.bf16.mxu0 0
        %933 = vmatpush1.bf16.msra.mxu0 0
        %934 = vmatprep.subr.bf16.mxu0 0
        %935 = vmatpush1.bf16.msra.mxu0 0
        %936 = vmatprep.subr.bf16.mxu0 0
        %937 = vmatpush1.bf16.msra.mxu0 0
        %938 = vmatprep.subr.bf16.mxu0 0
        %939 = vmatpush1.bf16.msra.mxu0 0
        %940 = vmatprep.subr.bf16.mxu0 0
        %941 = vmatpush1.bf16.msra.mxu0 0
        %942 = vmatprep.subr.bf16.mxu0 0
        %943 = vmatpush1.bf16.msra.mxu0 0
        %944 = vmatprep.subr.bf16.mxu0 0
        %945 = vmatpush1.bf16.msra.mxu0 0
        %946 = vmatprep.subr.bf16.mxu0 0
        %947 = vmatpush1.bf16.msra.mxu0 0
        %948 = vmatprep.subr.bf16.mxu0 0
        %949 = vmatpush1.bf16.msra.mxu0 0
        %950 = vmatprep.subr.bf16.mxu0 0
        %951 = vmatpush1.bf16.msra.mxu0 0
        %952 = vmatprep.mubr.bf16.mxu0 0
        %953 = vmatmul.mubr.bf16.gmra.mrb[0].mxu0 %v918
        %v954 = vpop.f32.mrb[0].mxu0
        %v955 = vadd.f32 %v902, %v954
        %v956 = vpop.f32.mrb[0].mxu0
        %v957 = vpop.f32.mrb[0].mxu0
        %v958 = vpop.f32.mrb[0].mxu0
        %959 = vdwg.mxu0
        %v960 = vld [vmem:[%s791] sm:$0xf]
        %v961 = vld [vmem:[%s791 + $0x4] sm:$0xf]
        %v962 = vld [vmem:[%s791 + $0x8] sm:$0xf]
        %v963 = vld [vmem:[%s791 + $0xc] sm:$0xf]
        %v964 = vlaneseq
        %v965 = vshrl.u32 %v964, 7
        %v966 = vlaneseq
        %v967 = vand.u32 %v966, 127
        %vm968 = vcmp.gt.s32.totalorder %v967, %v965
        %v969 = vld [vmem:[%s766] sm:$0x1]
        %vm970 = vcmp.eq.s32.totalorder %v969, 4294967295
        %v971 = vsel %vm970, 1, 0
        %v972 = vlaneseq
        %v973 = vshrl.u32 %v972, 7
        %v974 = vsub.s32 0, %v973
        %v975 = vrot.slane %v971, %v974
        %vm976 = vcmp.eq.s32.totalorder %v975, 1
        %vm977 = vmor %vm976, %vm968
        %v978 = vsel %vm977, -1e+09, 0.0
        %v979 = vmul.f32 %v955, 0.25
        %v980 = vpack.c.bf16 %v979, %v979
        %v981 = vpack.c.bf16 %v955, %v955
        %983 = vrot.lane.b32.xlu0 %v981, 96
        %v984 = vpop.permute.xlu0 %983
        %vm985 = vcmask 130048
        %v987 = vsel %vm985, %v980, 0
        %v990 = vsel %vm985, %v984, 0
        %992 = vmatprep.subr.bf16.mxu0 0
        %993 = vmatpush1.bf16.xpose.msra.mxu0 %v990
        %994 = vmatprep.subr.bf16.mxu0 0
        %995 = vmatpush1.bf16.xpose.msra.mxu0 0
        %996 = vmatprep.subr.bf16.mxu0 0
        %997 = vmatpush1.bf16.xpose.msra.mxu0 0
        %998 = vmatprep.subr.bf16.mxu0 0
        %999 = vmatpush1.bf16.xpose.msra.mxu0 0
        %1000 = vmatprep.subr.bf16.mxu0 0
        %1001 = vmatpush1.bf16.xpose.msra.mxu0 0
        %1002 = vmatprep.subr.bf16.mxu0 0
        %1003 = vmatpush1.bf16.xpose.msra.mxu0 0
        %1004 = vmatprep.subr.bf16.mxu0 0
        %1005 = vmatpush1.bf16.xpose.msra.mxu0 0
        %1006 = vmatprep.subr.bf16.mxu0 0
        %1007 = vmatpush1.bf16.xpose.msra.mxu0 0
        %1008 = vmatprep.subr.bf16.mxu0 0
        %1009 = vmatpush1.bf16.xpose.msra.mxu0 0
        %1010 = vmatprep.subr.bf16.mxu0 0
        %1011 = vmatpush1.bf16.xpose.msra.mxu0 0
        %1012 = vmatprep.subr.bf16.mxu0 0
        %1013 = vmatpush1.bf16.xpose.msra.mxu0 0
        %1014 = vmatprep.subr.bf16.mxu0 0
        %1015 = vmatpush1.bf16.xpose.msra.mxu0 0
        %1016 = vmatprep.subr.bf16.mxu0 0
        %1017 = vmatpush1.bf16.xpose.msra.mxu0 0
        %1018 = vmatprep.subr.bf16.mxu0 0
        %1019 = vmatpush1.bf16.xpose.msra.mxu0 0
        %1020 = vmatprep.subr.bf16.mxu0 0
        %1021 = vmatpush1.bf16.xpose.msra.mxu0 0
        %1022 = vmatprep.subr.bf16.mxu0 0
        %1023 = vmatpush1.bf16.xpose.msra.mxu0 0
        %1024 = vmatprep.mubr.bf16.mxu0 0
        %1025 = vmatmul.mubr.bf16.gmra.mrb[0].mxu0 %v987
        %v1026 = vpop.f32.mrb[0].mxu0
        %v1027 = vadd.f32 %v978, %v1026
        %v1028 = vpop.f32.mrb[0].mxu0
        %v1029 = vpop.f32.mrb[0].mxu0
        %v1030 = vpop.f32.mrb[0].mxu0
        %1031 = vdwg.mxu0
        %vm1032 = vcmask 64512
        %v1033 = vsel %vm1032, %v1027, -inf
        %1034 = vmax.xlane.f32.xlu0 %v1033
        %v1035 = vpop.xlane.xlu0 %1034
        %v1036 = vsub.f32 %v1027, %v1035
        %v1037 = vmul.f32 %v1036, 1.442695
        %v1038 = vpow.pop %v1037
        %v1039 = vsel %vm1032, %v1038, 0.0
        %1040 = vadd.xlane.f32.xlu0 %v1039
        %v1041 = vpop.xlane.xlu0 %1040
        %v1042 = vrcp.pop %v1041
        %v1043 = vmul.f32 %v1038, %v1042
        %v1044 = vpack.c.bf16 %v1043, %v1043
        %1045 = vrot.lane.b32.xlu0 %v981, 64
        %v1046 = vpop.permute.xlu0 %1045
        %v1048 = vsel %vm1032, %v1044, 0
        %vm1050 = vcmask 1043456
        %v1052 = vsel %vm1050, %v1046, 0
        %1054 = vmatprep.subr.bf16.mxu0 0
        %1055 = vmatpush1.bf16.msra.mxu0 %v1052
        %1056 = vmatprep.subr.bf16.mxu0 0
        %1057 = vmatpush1.bf16.msra.mxu0 0
        %1058 = vmatprep.subr.bf16.mxu0 0
        %1059 = vmatpush1.bf16.msra.mxu0 0
        %1060 = vmatprep.subr.bf16.mxu0 0
        %1061 = vmatpush1.bf16.msra.mxu0 0
        %1062 = vmatprep.subr.bf16.mxu0 0
        %1063 = vmatpush1.bf16.msra.mxu0 0
        %1064 = vmatprep.subr.bf16.mxu0 0
        %1065 = vmatpush1.bf16.msra.mxu0 0
        %1066 = vmatprep.subr.bf16.mxu0 0
        %1067 = vmatpush1.bf16.msra.mxu0 0
        %1068 = vmatprep.subr.bf16.mxu0 0
        %1069 = vmatpush1.bf16.msra.mxu0 0
        %1070 = vmatprep.subr.bf16.mxu0 0
        %1071 = vmatpush1.bf16.msra.mxu0 0
        %1072 = vmatprep.subr.bf16.mxu0 0
        %1073 = vmatpush1.bf16.msra.mxu0 0
        %1074 = vmatprep.subr.bf16.mxu0 0
        %1075 = vmatpush1.bf16.msra.mxu0 0
        %1076 = vmatprep.subr.bf16.mxu0 0
        %1077 = vmatpush1.bf16.msra.mxu0 0
        %1078 = vmatprep.subr.bf16.mxu0 0
        %1079 = vmatpush1.bf16.msra.mxu0 0
        %1080 = vmatprep.subr.bf16.mxu0 0
        %1081 = vmatpush1.bf16.msra.mxu0 0
        %1082 = vmatprep.subr.bf16.mxu0 0
        %1083 = vmatpush1.bf16.msra.mxu0 0
        %1084 = vmatprep.subr.bf16.mxu0 0
        %1085 = vmatpush1.bf16.msra.mxu0 0
        %1086 = vmatprep.mubr.bf16.mxu0 0
        %1087 = vmatmul.mubr.bf16.gmra.mrb[0].mxu0 %v1048
        %v1088 = vpop.f32.mrb[0].mxu0
        %v1089 = vadd.f32 0.0, %v1088
        %v1090 = vpop.f32.mrb[0].mxu0
        %v1091 = vpop.f32.mrb[0].mxu0
        %v1092 = vpop.f32.mrb[0].mxu0
        %1093 = vdwg.mxu0
        %v1094 = vpack.c.bf16 %v1089, %v1089
        %1096 = vrot.lane.b32.xlu0 %v980, 112
        %v1097 = vpop.permute.xlu0 %1096
        %1098 = vrot.lane.b32.xlu0 %v981, 80
        %v1099 = vpop.permute.xlu0 %1098
        %v1101 = vsel %vm985, %v1097, 0
        %v1104 = vsel %vm985, %v1099, 0
        %1106 = vmatprep.subr.bf16.mxu0 0
        %1107 = vmatpush1.bf16.xpose.msra.mxu0 %v1104
        %1108 = vmatprep.subr.bf16.mxu0 0
        %1109 = vmatpush1.bf16.xpose.msra.mxu0 0
        %1110 = vmatprep.subr.bf16.mxu0 0
        %1111 = vmatpush1.bf16.xpose.msra.mxu0 0
        %1112 = vmatprep.subr.bf16.mxu0 0
        %1113 = vmatpush1.bf16.xpose.msra.mxu0 0
        %1114 = vmatprep.subr.bf16.mxu0 0
        %1115 = vmatpush1.bf16.xpose.msra.mxu0 0
        %1116 = vmatprep.subr.bf16.mxu0 0
        %1117 = vmatpush1.bf16.xpose.msra.mxu0 0
        %1118 = vmatprep.subr.bf16.mxu0 0
        %1119 = vmatpush1.bf16.xpose.msra.mxu0 0
        %1120 = vmatprep.subr.bf16.mxu0 0
        %1121 = vmatpush1.bf16.xpose.msra.mxu0 0
        %1122 = vmatprep.subr.bf16.mxu0 0
        %1123 = vmatpush1.bf16.xpose.msra.mxu0 0
        %1124 = vmatprep.subr.bf16.mxu0 0
        %1125 = vmatpush1.bf16.xpose.msra.mxu0 0
        %1126 = vmatprep.subr.bf16.mxu0 0
        %1127 = vmatpush1.bf16.xpose.msra.mxu0 0
        %1128 = vmatprep.subr.bf16.mxu0 0
        %1129 = vmatpush1.bf16.xpose.msra.mxu0 0
        %1130 = vmatprep.subr.bf16.mxu0 0
        %1131 = vmatpush1.bf16.xpose.msra.mxu0 0
        %1132 = vmatprep.subr.bf16.mxu0 0
        %1133 = vmatpush1.bf16.xpose.msra.mxu0 0
        %1134 = vmatprep.subr.bf16.mxu0 0
        %1135 = vmatpush1.bf16.xpose.msra.mxu0 0
        %1136 = vmatprep.subr.bf16.mxu0 0
        %1137 = vmatpush1.bf16.xpose.msra.mxu0 0
        %1138 = vmatprep.mubr.bf16.mxu0 0
        %1139 = vmatmul.mubr.bf16.gmra.mrb[0].mxu0 %v1101
        %v1140 = vpop.f32.mrb[0].mxu0
        %v1141 = vadd.f32 %v978, %v1140
        %v1142 = vpop.f32.mrb[0].mxu0
        %v1143 = vpop.f32.mrb[0].mxu0
        %v1144 = vpop.f32.mrb[0].mxu0
        %1145 = vdwg.mxu0
        %v1146 = vsel %vm1032, %v1141, -inf
        %1147 = vmax.xlane.f32.xlu0 %v1146
        %v1148 = vpop.xlane.xlu0 %1147
        %v1149 = vsub.f32 %v1141, %v1148
        %v1150 = vmul.f32 %v1149, 1.442695
        %v1151 = vpow.pop %v1150
        %v1152 = vsel %vm1032, %v1151, 0.0
        %1153 = vadd.xlane.f32.xlu0 %v1152
        %v1154 = vpop.xlane.xlu0 %1153
        %v1155 = vrcp.pop %v1154
        %v1156 = vmul.f32 %v1151, %v1155
        %v1157 = vpack.c.bf16 %v1156, %v1156
        %1158 = vrot.lane.b32.xlu0 %v981, 48
        %v1159 = vpop.permute.xlu0 %1158
        %v1161 = vsel %vm1032, %v1157, 0
        %v1164 = vsel %vm1050, %v1159, 0
        %1166 = vmatprep.subr.bf16.mxu0 0
        %1167 = vmatpush1.bf16.msra.mxu0 %v1164
        %1168 = vmatprep.subr.bf16.mxu0 0
        %1169 = vmatpush1.bf16.msra.mxu0 0
        %1170 = vmatprep.subr.bf16.mxu0 0
        %1171 = vmatpush1.bf16.msra.mxu0 0
        %1172 = vmatprep.subr.bf16.mxu0 0
        %1173 = vmatpush1.bf16.msra.mxu0 0
        %1174 = vmatprep.subr.bf16.mxu0 0
        %1175 = vmatpush1.bf16.msra.mxu0 0
        %1176 = vmatprep.subr.bf16.mxu0 0
        %1177 = vmatpush1.bf16.msra.mxu0 0
        %1178 = vmatprep.subr.bf16.mxu0 0
        %1179 = vmatpush1.bf16.msra.mxu0 0
        %1180 = vmatprep.subr.bf16.mxu0 0
        %1181 = vmatpush1.bf16.msra.mxu0 0
        %1182 = vmatprep.subr.bf16.mxu0 0
        %1183 = vmatpush1.bf16.msra.mxu0 0
        %1184 = vmatprep.subr.bf16.mxu0 0
        %1185 = vmatpush1.bf16.msra.mxu0 0
        %1186 = vmatprep.subr.bf16.mxu0 0
        %1187 = vmatpush1.bf16.msra.mxu0 0
        %1188 = vmatprep.subr.bf16.mxu0 0
        %1189 = vmatpush1.bf16.msra.mxu0 0
        %1190 = vmatprep.subr.bf16.mxu0 0
        %1191 = vmatpush1.bf16.msra.mxu0 0
        %1192 = vmatprep.subr.bf16.mxu0 0
        %1193 = vmatpush1.bf16.msra.mxu0 0
        %1194 = vmatprep.subr.bf16.mxu0 0
        %1195 = vmatpush1.bf16.msra.mxu0 0
        %1196 = vmatprep.subr.bf16.mxu0 0
        %1197 = vmatpush1.bf16.msra.mxu0 0
        %1198 = vmatprep.mubr.bf16.mxu0 0
        %1199 = vmatmul.mubr.bf16.gmra.mrb[0].mxu0 %v1161
        %v1200 = vpop.f32.mrb[0].mxu0
        %v1201 = vadd.f32 0.0, %v1200
        %v1202 = vpop.f32.mrb[0].mxu0
        %v1203 = vpop.f32.mrb[0].mxu0
        %v1204 = vpop.f32.mrb[0].mxu0
        %1205 = vdwg.mxu0
        %v1206 = vpack.c.bf16 %v1201, %v1201
        %v1209 = vunpack.c.l.b16 %v962
        %v1210 = vunpack.c.l.b16 %v963
        %v1211 = vpack.c.b16 %v1210, %v1209
        %v1214 = vsel %vm985, %v1206, 0
        %1216 = vmatprep.subr.bf16.mxu0 0
        %1217 = vmatpush1.bf16.msra.mxu0 %v1211
        %1218 = vmatprep.subr.bf16.mxu0 0
        %1219 = vmatpush1.bf16.msra.mxu0 0
        %1220 = vmatprep.subr.bf16.mxu0 0
        %1221 = vmatpush1.bf16.msra.mxu0 0
        %1222 = vmatprep.subr.bf16.mxu0 0
        %1223 = vmatpush1.bf16.msra.mxu0 0
        %1224 = vmatprep.subr.bf16.mxu0 0
        %1225 = vmatpush1.bf16.msra.mxu0 0
        %1226 = vmatprep.subr.bf16.mxu0 0
        %1227 = vmatpush1.bf16.msra.mxu0 0
        %1228 = vmatprep.subr.bf16.mxu0 0
        %1229 = vmatpush1.bf16.msra.mxu0 0
        %1230 = vmatprep.subr.bf16.mxu0 0
        %1231 = vmatpush1.bf16.msra.mxu0 0
        %1232 = vmatprep.subr.bf16.mxu0 0
        %1233 = vmatpush1.bf16.msra.mxu0 0
        %1234 = vmatprep.subr.bf16.mxu0 0
        %1235 = vmatpush1.bf16.msra.mxu0 0
        %1236 = vmatprep.subr.bf16.mxu0 0
        %1237 = vmatpush1.bf16.msra.mxu0 0
        %1238 = vmatprep.subr.bf16.mxu0 0
        %1239 = vmatpush1.bf16.msra.mxu0 0
        %1240 = vmatprep.subr.bf16.mxu0 0
        %1241 = vmatpush1.bf16.msra.mxu0 0
        %1242 = vmatprep.subr.bf16.mxu0 0
        %1243 = vmatpush1.bf16.msra.mxu0 0
        %1244 = vmatprep.subr.bf16.mxu0 0
        %1245 = vmatpush1.bf16.msra.mxu0 0
        %1246 = vmatprep.subr.bf16.mxu0 0
        %1247 = vmatpush1.bf16.msra.mxu0 0
        %1248 = vmatprep.mubr.bf16.mxu0 0
        %1249 = vmatmul.mubr.bf16.gmra.mrb[0].mxu0 %v1214
        %v1250 = vpop.f32.mrb[0].mxu0
        %v1251 = vadd.f32 0.0, %v1250
        %v1252 = vpop.f32.mrb[0].mxu0
        %v1253 = vpop.f32.mrb[0].mxu0
        %v1254 = vpop.f32.mrb[0].mxu0
        %1255 = vdwg.mxu0
        %v1258 = vunpack.c.l.b16 %v960
        %v1259 = vunpack.c.l.b16 %v961
        %v1260 = vpack.c.b16 %v1259, %v1258
        %v1263 = vsel %vm985, %v1094, 0
        %1265 = vmatprep.subr.bf16.mxu0 0
        %1266 = vmatpush1.bf16.msra.mxu0 %v1260
        %1267 = vmatprep.subr.bf16.mxu0 0
        %1268 = vmatpush1.bf16.msra.mxu0 0
        %1269 = vmatprep.subr.bf16.mxu0 0
        %1270 = vmatpush1.bf16.msra.mxu0 0
        %1271 = vmatprep.subr.bf16.mxu0 0
        %1272 = vmatpush1.bf16.msra.mxu0 0
        %1273 = vmatprep.subr.bf16.mxu0 0
        %1274 = vmatpush1.bf16.msra.mxu0 0
        %1275 = vmatprep.subr.bf16.mxu0 0
        %1276 = vmatpush1.bf16.msra.mxu0 0
        %1277 = vmatprep.subr.bf16.mxu0 0
        %1278 = vmatpush1.bf16.msra.mxu0 0
        %1279 = vmatprep.subr.bf16.mxu0 0
        %1280 = vmatpush1.bf16.msra.mxu0 0
        %1281 = vmatprep.subr.bf16.mxu0 0
        %1282 = vmatpush1.bf16.msra.mxu0 0
        %1283 = vmatprep.subr.bf16.mxu0 0
        %1284 = vmatpush1.bf16.msra.mxu0 0
        %1285 = vmatprep.subr.bf16.mxu0 0
        %1286 = vmatpush1.bf16.msra.mxu0 0
        %1287 = vmatprep.subr.bf16.mxu0 0
        %1288 = vmatpush1.bf16.msra.mxu0 0
        %1289 = vmatprep.subr.bf16.mxu0 0
        %1290 = vmatpush1.bf16.msra.mxu0 0
        %1291 = vmatprep.subr.bf16.mxu0 0
        %1292 = vmatpush1.bf16.msra.mxu0 0
        %1293 = vmatprep.subr.bf16.mxu0 0
        %1294 = vmatpush1.bf16.msra.mxu0 0
        %1295 = vmatprep.subr.bf16.mxu0 0
        %1296 = vmatpush1.bf16.msra.mxu0 0
        %1297 = vmatprep.mubr.bf16.mxu0 0
        %1298 = vmatmul.mubr.bf16.gmra.mrb[0].mxu0 %v1263
        %v1299 = vpop.f32.mrb[0].mxu0
        %v1300 = vadd.f32 %v1251, %v1299
        %v1301 = vpop.f32.mrb[0].mxu0
        %v1302 = vpop.f32.mrb[0].mxu0
        %v1303 = vpop.f32.mrb[0].mxu0
        %1304 = vdwg.mxu0
        %v1305 = vld [vmem:[%s794] sm:$0x1]
        %v1307 = vlaneseq
        %v1308 = vshrl.u32 %v1307, 7
        %v1309 = vsub.s32 0, %v1308
        %v1310 = vrot.slane %v1305, %v1309
        %v1312 = vadd.f32 %v1300, %v1310
        %v1313 = vadd.f32 %v1312, %v890
        %v1314 = vld [vmem:[%s797] sm:$0x1]
        %v1315 = vld [vmem:[%s800] sm:$0x1]
        %v1316 = vsel %vm916, %v1313, 0.0
        %1317 = vadd.xlane.f32.xlu0 %v1316
        %v1318 = vpop.xlane.xlu0 %1317
        %v1319 = vrcp.pop 32.0
        %v1320 = vmul.f32 %v1318, %v1319
        %v1321 = vsub.f32 %v1313, %v1320
        %v1322 = vmul.f32 %v1321, %v1321
        %v1323 = vsel %vm916, %v1322, 0.0
        %1324 = vadd.xlane.f32.xlu0 %v1323
        %v1325 = vpop.xlane.xlu0 %1324
        %v1326 = vmul.f32 %v1325, %v1319
        %v1327 = vadd.f32 %v1326, 1e-05
        %v1328 = vrsqrt.pop %v1327
        %v1329 = vmul.f32 %v1321, %v1328
        %v1331 = vlaneseq
        %v1332 = vshrl.u32 %v1331, 7
        %v1333 = vsub.s32 0, %v1332
        %v1334 = vrot.slane %v1314, %v1333
        %v1336 = vmul.f32 %v1329, %v1334
        %v1338 = vlaneseq
        %v1339 = vshrl.u32 %v1338, 7
        %v1340 = vsub.s32 0, %v1339
        %v1341 = vrot.slane %v1315, %v1340
        %v1343 = vadd.f32 %v1336, %v1341
        %1345 = vset.pattern.permute.xlu0 0
        %1346 = vperm.xlu0 %1345, %v891
        %v1347 = vpop.permute.xlu0 %1346
        %v1349 = vmul.f32 %v1343, %v1347
        %v1350 = vpack.c.bf16 %v1349, %v1349
        %v1351 = vld [vmem:[%s805] sm:$0xf]
        %v1352 = vld [vmem:[%s805 + $0x4] sm:$0xf]
        %v1353 = vld [vmem:[%s805 + $0x8] sm:$0xf]
        %v1354 = vld [vmem:[%s805 + $0xc] sm:$0xf]
        %v1355 = vld [vmem:[%s808] sm:$0x1]
        %v1357 = vlaneseq
        %v1358 = vshrl.u32 %v1357, 7
        %v1359 = vsub.s32 0, %v1358
        %v1360 = vrot.slane %v1355, %v1359
        %v1366 = vunpack.c.l.b16 %v1351
        %v1367 = vunpack.c.l.b16 %v1352
        %v1368 = vunpack.c.l.b16 %v1353
        %v1369 = vunpack.c.l.b16 %v1354
        %v1370 = vpack.c.b16 %v1367, %v1366
        %v1371 = vpack.c.b16 %v1369, %v1368
        %v1375 = vsel %vm916, %v1350, 0
        %1377 = vmatprep.subr.bf16.mxu0 0
        %1378 = vmatpush1.bf16.msra.mxu0 %v1370
        %1379 = vmatprep.subr.bf16.mxu0 0
        %1380 = vmatpush1.bf16.msra.mxu0 %v1371
        %1381 = vmatprep.subr.bf16.mxu0 0
        %1382 = vmatpush1.bf16.msra.mxu0 0
        %1383 = vmatprep.subr.bf16.mxu0 0
        %1384 = vmatpush1.bf16.msra.mxu0 0
        %1385 = vmatprep.subr.bf16.mxu0 0
        %1386 = vmatpush1.bf16.msra.mxu0 0
        %1387 = vmatprep.subr.bf16.mxu0 0
        %1388 = vmatpush1.bf16.msra.mxu0 0
        %1389 = vmatprep.subr.bf16.mxu0 0
        %1390 = vmatpush1.bf16.msra.mxu0 0
        %1391 = vmatprep.subr.bf16.mxu0 0
        %1392 = vmatpush1.bf16.msra.mxu0 0
        %1393 = vmatprep.subr.bf16.mxu0 0
        %1394 = vmatpush1.bf16.msra.mxu0 0
        %1395 = vmatprep.subr.bf16.mxu0 0
        %1396 = vmatpush1.bf16.msra.mxu0 0
        %1397 = vmatprep.subr.bf16.mxu0 0
        %1398 = vmatpush1.bf16.msra.mxu0 0
        %1399 = vmatprep.subr.bf16.mxu0 0
        %1400 = vmatpush1.bf16.msra.mxu0 0
        %1401 = vmatprep.subr.bf16.mxu0 0
        %1402 = vmatpush1.bf16.msra.mxu0 0
        %1403 = vmatprep.subr.bf16.mxu0 0
        %1404 = vmatpush1.bf16.msra.mxu0 0
        %1405 = vmatprep.subr.bf16.mxu0 0
        %1406 = vmatpush1.bf16.msra.mxu0 0
        %1407 = vmatprep.subr.bf16.mxu0 0
        %1408 = vmatpush1.bf16.msra.mxu0 0
        %1409 = vmatprep.mubr.bf16.mxu0 0
        %1410 = vmatmul.mubr.bf16.gmra.mrb[0].mxu0 %v1375
        %v1411 = vpop.f32.mrb[0].mxu0
        %v1412 = vadd.f32 %v1360, %v1411
        %v1413 = vpop.f32.mrb[0].mxu0
        %v1414 = vpop.f32.mrb[0].mxu0
        %v1415 = vpop.f32.mrb[0].mxu0
        %1416 = vdwg.mxu0
        %v1417 = vmax.f32 %v1412, 0.0
        %v1418 = vpack.c.bf16 %v1417, %v1417
        %v1419 = vld [vmem:[%s813] sm:$0xf]
        %v1420 = vld [vmem:[%s813 + $0x4] sm:$0xf]
        %v1421 = vld [vmem:[%s813 + $0x8] sm:$0xf]
        %v1422 = vld [vmem:[%s813 + $0xc] sm:$0xf]
        %v1423 = vld [vmem:[%s813 + $0x10] sm:$0xf]
        %v1424 = vld [vmem:[%s813 + $0x14] sm:$0xf]
        %v1425 = vld [vmem:[%s813 + $0x18] sm:$0xf]
        %v1426 = vld [vmem:[%s813 + $0x1c] sm:$0xf]
        %v1427 = vld [vmem:[%s816] sm:$0x1]
        %v1429 = vlaneseq
        %v1430 = vshrl.u32 %v1429, 7
        %v1431 = vsub.s32 0, %v1430
        %v1432 = vrot.slane %v1427, %v1431
        %v1442 = vunpack.c.l.b16 %v1419
        %v1443 = vunpack.c.l.b16 %v1420
        %v1444 = vunpack.c.l.b16 %v1421
        %v1445 = vunpack.c.l.b16 %v1422
        %v1446 = vunpack.c.l.b16 %v1423
        %v1447 = vunpack.c.l.b16 %v1424
        %v1448 = vunpack.c.l.b16 %v1425
        %v1449 = vunpack.c.l.b16 %v1426
        %v1450 = vpack.c.b16 %v1443, %v1442
        %v1451 = vpack.c.b16 %v1445, %v1444
        %v1452 = vpack.c.b16 %v1447, %v1446
        %v1453 = vpack.c.b16 %v1449, %v1448
        %vm1458 = vcmask 523264
        %v1460 = vsel %vm1458, %v1418, 0
        %1462 = vmatprep.subr.bf16.mxu0 0
        %1463 = vmatpush1.bf16.msra.mxu0 %v1450
        %1464 = vmatprep.subr.bf16.mxu0 0
        %1465 = vmatpush1.bf16.msra.mxu0 %v1451
        %1466 = vmatprep.subr.bf16.mxu0 0
        %1467 = vmatpush1.bf16.msra.mxu0 %v1452
        %1468 = vmatprep.subr.bf16.mxu0 0
        %1469 = vmatpush1.bf16.msra.mxu0 %v1453
        %1470 = vmatprep.subr.bf16.mxu0 0
        %1471 = vmatpush1.bf16.msra.mxu0 0
        %1472 = vmatprep.subr.bf16.mxu0 0
        %1473 = vmatpush1.bf16.msra.mxu0 0
        %1474 = vmatprep.subr.bf16.mxu0 0
        %1475 = vmatpush1.bf16.msra.mxu0 0
        %1476 = vmatprep.subr.bf16.mxu0 0
        %1477 = vmatpush1.bf16.msra.mxu0 0
        %1478 = vmatprep.subr.bf16.mxu0 0
        %1479 = vmatpush1.bf16.msra.mxu0 0
        %1480 = vmatprep.subr.bf16.mxu0 0
        %1481 = vmatpush1.bf16.msra.mxu0 0
        %1482 = vmatprep.subr.bf16.mxu0 0
        %1483 = vmatpush1.bf16.msra.mxu0 0
        %1484 = vmatprep.subr.bf16.mxu0 0
        %1485 = vmatpush1.bf16.msra.mxu0 0
        %1486 = vmatprep.subr.bf16.mxu0 0
        %1487 = vmatpush1.bf16.msra.mxu0 0
        %1488 = vmatprep.subr.bf16.mxu0 0
        %1489 = vmatpush1.bf16.msra.mxu0 0
        %1490 = vmatprep.subr.bf16.mxu0 0
        %1491 = vmatpush1.bf16.msra.mxu0 0
        %1492 = vmatprep.subr.bf16.mxu0 0
        %1493 = vmatpush1.bf16.msra.mxu0 0
        %1494 = vmatprep.mubr.bf16.mxu0 0
        %1495 = vmatmul.mubr.bf16.gmra.mrb[0].mxu0 %v1460
        %v1496 = vpop.f32.mrb[0].mxu0
        %v1497 = vadd.f32 %v1432, %v1496
        %v1498 = vpop.f32.mrb[0].mxu0
        %v1499 = vpop.f32.mrb[0].mxu0
        %v1500 = vpop.f32.mrb[0].mxu0
        %1501 = vdwg.mxu0
        %v1502 = vadd.f32 %v1497, %v1349
        %v1503 = vld [vmem:[%s819] sm:$0x1]
        %v1504 = vld [vmem:[%s822] sm:$0x1]
        %v1505 = vsel %vm916, %v1502, 0.0
        %1506 = vadd.xlane.f32.xlu0 %v1505
        %v1507 = vpop.xlane.xlu0 %1506
        %v1508 = vmul.f32 %v1507, %v1319
        %v1509 = vsub.f32 %v1502, %v1508
        %v1510 = vmul.f32 %v1509, %v1509
        %v1511 = vsel %vm916, %v1510, 0.0
        %1512 = vadd.xlane.f32.xlu0 %v1511
        %v1513 = vpop.xlane.xlu0 %1512
        %v1514 = vmul.f32 %v1513, %v1319
        %v1515 = vadd.f32 %v1514, 1e-05
        %v1516 = vrsqrt.pop %v1515
        %v1517 = vmul.f32 %v1509, %v1516
        %v1519 = vlaneseq
        %v1520 = vshrl.u32 %v1519, 7
        %v1521 = vsub.s32 0, %v1520
        %v1522 = vrot.slane %v1503, %v1521
        %v1524 = vmul.f32 %v1517, %v1522
        %v1526 = vlaneseq
        %v1527 = vshrl.u32 %v1526, 7
        %v1528 = vsub.s32 0, %v1527
        %v1529 = vrot.slane %v1504, %v1528
        %v1531 = vadd.f32 %v1524, %v1529
        %v1532 = vmul.f32 %v1531, %v1347
        %1533 = vst.msk [vmem:[#allocation2] sm:$0xff] %vm916, %v1532
        %p1534 = scmp.eq.s32.totalorder %s37, 1
        // Predicated region
        $region97: #{encoder_forward.1} parent=91 // pred_check
          %p1535 = pneg %p1534
        $region98: #{encoder_forward.1} parent=91 // pred_check_branch
          %1537 = sbr.rel (%p1535) target = $region100
        $region99: #{encoder_forward.1} parent=91 // pred_region
          %1538 = vst.msk [vmem:[%s763] sm:$0xff] %vm916, %v1532
        $region100: #{encoder_forward.1} parent=91 // pred_fallthru
          _
        %s1539 = sand.u32 %s510, 1
        %s1540 = scalar_lea.sflag [#allocation4], %s1539
        %s1541 = sand.u32 %s510, 1
        %s1542 = smul.addr %s1541, 8
        %s1543 = scalar_lea.vmem [#allocation3], %s1542
        // Predicated region
        $region101: #{encoder_forward.1} parent=91 // pred_check
          %p1544 = pneg %p520
        $region102: #{encoder_forward.1} parent=91 // pred_check_branch
          %1546 = sbr.rel (%p1544) target = $region104
        $region103: #{encoder_forward.1} parent=91 // pred_region
          %s1548 = ssub.s32 128, 128
          %1549 = vsyncadd %s1540, %s1548
          %s1550 = smul.addr %s36, 128
          %s1551 = scalar_lea.hbm %s18, %s1550
          %s1553 = sshll.u32 %s1543, 4
          %s1554 = int_to_ptr.vmem [resolvable:$true] %s1553
          %1556 = dma.vmem_to_hbm [thread:$0]  %s1554, 128, %s1551, %s1540
        $region104: #{encoder_forward.1} parent=91 // pred_fallthru
          _
      $region92: #{encoder_forward.1} parent=5 // pred_fallthru
        _
      %p1557 = scmp.le.s32.totalorder 2, %s27
      // Predicated region
      $region105: #{encoder_forward.1} parent=5 // pred_check
        %p1558 = pneg %p1557
      $region106: #{encoder_forward.1} parent=5 // pred_check_branch
        %1560 = sbr.rel (%p1558) target = $region108
      $region107: #{encoder_forward.1} parent=5 // pred_region
        %s1561 = ssub.s32 %s27, 2
        // Predicated region
        $region109: #{encoder_forward.1} parent=107 // pred_check
          %p1562 = pneg %p526
        $region110: #{encoder_forward.1} parent=107 // pred_check_branch
          %1564 = sbr.rel (%p1562) target = $region112
        $region111: #{encoder_forward.1} parent=107 // pred_region
          %s1565 = sand.u32 %s511, 1
          %s1566 = scalar_lea.sflag [#allocation4], %s1565
          %s1567 = sand.u32 %s511, 1
          %s1568 = smul.addr %s1567, 8
          %s1569 = scalar_lea.vmem [#allocation3], %s1568
          %1570 = dma.done %s1566, 128
        $region112: #{encoder_forward.1} parent=107 // pred_fallthru
          _
      $region108: #{encoder_forward.1} parent=5 // pred_fallthru
        _
    $region6: #{encoder_forward.1} parent=1 // loop_footer
      %s31 = sadd.s32 1, %s27
    $region7: #{encoder_forward.1} parent=1 // loop_footer_branch
      %26 = sbr.rel target = $region3
    $region8: #{encoder_forward.1} parent=1 // loop_exit
      _
    %1571 = vsyncpa [#allocation4], 1
    %s1572 = scalar_lea.sflag [#allocation4], 1
    %1573 = vsyncpa %s1572, 1

</llo_original>
